<compile_context>
chip_gen: v7x
topology: tpu7x:2x2x1
jax: 0.10.0
libtpu: 0.0.40
codegen_flags: <defaults>
</compile_context>

<pallas_src>
import jax
import jax.numpy as jnp
import numpy as np
from jax import lax
from jax.experimental import pallas as pl
from jax.experimental.pallas import tpu as pltpu

C1 = 20      # conv channels  (variant 0)
LW = 30      # linear width   (variant 0)
NCLS = 10

# Lane-padded widths (multiples of 128 so max-slices / matmul outputs are lane-dense).
P1 = 384     # conv1 per-pool-position output width: 16*C1 = 320 -> 384
P2 = 128     # conv2 per-pool-position output width:  4*C1 =  80 -> 128
PH = 128     # fc1 hidden width:                        LW =  30 -> 128


# ----------------------------- fused Pallas kernel -----------------------------

def _digits_fused_kernel(x_ref, w1_ref, b1_ref, w2_ref, b2_ref,
                         fw1_ref, fb1_ref, fw2_ref, fb2_ref, o_ref):
    # x_ref  : (TB, 64)        flattened 8x8 input image (1 channel)
    # w1_ref : (64, 4*P1)      conv1-as-matmul, 4 pool positions concatenated along N
    # b1_ref : (1, P1)
    # w2_ref : (P1, 4*P2)      conv2-as-matmul, 4 pool positions concatenated along N
    # b2_ref : (1, P2)
    # fw1_ref: (P2, PH)        fc1 weight, NCHW-flatten permutation pre-applied, padded
    # fb1_ref: (1, PH)
    # fw2_ref: (PH, 10), fb2_ref: (1, 10)
    x = x_ref[...]

    # conv1 fused with 2x2 max-pool: ONE matmul covering all 4 pool positions, then a
    # tree max over 4 lane-aligned slices, a single bias add (hoisted out of the max,
    # valid since bias is constant across pool positions) and ReLU.
    y = jnp.dot(x, w1_ref[...], preferred_element_type=jnp.float32)      # (TB, 4*P1)
    m = jnp.maximum(jnp.maximum(y[:, 0 * P1:1 * P1], y[:, 1 * P1:2 * P1]),
                    jnp.maximum(y[:, 2 * P1:3 * P1], y[:, 3 * P1:4 * P1]))
    a1 = jnp.maximum(m + b1_ref[...], 0.0)                               # (TB, P1)

    # conv2 fused with 2x2 max-pool, bias, ReLU (same structure).
    y = jnp.dot(a1, w2_ref[...], preferred_element_type=jnp.float32)     # (TB, 4*P2)
    m = jnp.maximum(jnp.maximum(y[:, 0 * P2:1 * P2], y[:, 1 * P2:2 * P2]),
                    jnp.maximum(y[:, 2 * P2:3 * P2], y[:, 3 * P2:4 * P2]))
    a2 = jnp.maximum(m + b2_ref[...], 0.0)                               # (TB, P2)

    # fc1 + ReLU (padded lanes have zero weight & bias, so they stay exactly 0).
    h = jnp.maximum(
        jnp.dot(a2, fw1_ref[...], preferred_element_type=jnp.float32) + fb1_ref[...],
        0.0)                                                             # (TB, PH)

    # fc2 + log_softmax over the 10 real classes only (fw2 keeps N=10 so the padded
    # columns never enter the normalizer).
    logits = (jnp.dot(h, fw2_ref[...], preferred_element_type=jnp.float32)
              + fb2_ref[...])                                            # (TB, 10)
    s = logits - jnp.max(logits, axis=-1, keepdims=True)
    o_ref[...] = s - jnp.log(jnp.sum(jnp.exp(s), axis=-1, keepdims=True))


def digits_forward(x, packed, *, tb=None):
    """x: (B, 8, 8) float32 -> (B, 10) log-probabilities (matches PyTorch forward)."""
    B = x.shape[0]
    x2d = x.reshape(B, 64)                                  # contiguous reshape only
    w1, b1, w2, b2, fw1, fb1, fw2, fb2 = packed

    # Batch tiling: do NOT split tiny batches into multiple grid steps (each step costs
    # ~0.35us, more than the whole compute); for serving-size batches use TB=256 rows per
    # step and shard the batch axis across TensorCores ("parallel").
    if tb is None:
        tb = B if (B <= 256 or B % 256 != 0) else 256
    assert B % tb == 0
    grid = (B // tb,)

    const = lambda b: (0, 0)                                # weights resident in VMEM

    flops = 2 * B * (64 * 4 * P1 + P1 * 4 * P2 + P2 * PH + PH * NCLS)
    weight_bytes = sum(int(np.prod(a.shape)) * 4 for a in packed)
    cost = pl.CostEstimate(
        flops=flops,
        bytes_accessed=weight_bytes + B * 64 * 4 + B * NCLS * 4,
        transcendentals=B * NCLS)

    return pl.pallas_call(
        _digits_fused_kernel,
        out_shape=jax.ShapeDtypeStruct((B, NCLS), jnp.float32),
        grid=grid,
        in_specs=[
            pl.BlockSpec((tb, 64), lambda b: (b, 0)),       # x: batch-dependent
            pl.BlockSpec(w1.shape, const),                  # weights: constant index
            pl.BlockSpec(b1.shape, const),
            pl.BlockSpec(w2.shape, const),
            pl.BlockSpec(b2.shape, const),
            pl.BlockSpec(fw1.shape, const),
            pl.BlockSpec(fb1.shape, const),
            pl.BlockSpec(fw2.shape, const),
            pl.BlockSpec(fb2.shape, const),
        ],
        out_specs=pl.BlockSpec((tb, NCLS), lambda b: (b, 0)),
        compiler_params=pltpu.CompilerParams(dimension_semantics=("parallel",)),
        cost_estimate=cost,
    )(x2d, w1, b1, w2, b2, fw1, fb1, fw2, fb2)


# ------------------------- pack-time weight construction -----------------------

def _conv_pool_matmul_weights(w_oihw, H, W):
    """Fold 'SAME-padded 3x3 conv evaluated at pool-window position (u,v)' into a dense
    matmul weight.

    Input activation layout (kernel-side): columns index (h*W + w)*Cin + cin.
    Output layout: columns index (oh*(W//2) + ow)*Cout + cout.
    Returns (4, H*W*Cin, (H//2)*(W//2)*Cout) float32, one matrix per (u, v)."""
    w = np.asarray(w_oihw, dtype=np.float32)            # (Cout, Cin, 3, 3)
    Cout, Cin, KH, KW = w.shape
    Ho, Wo = H // 2, W // 2
    mats = np.zeros((4, H, W, Cin, Ho, Wo, Cout), dtype=np.float32)
    for u in range(2):
        for v in range(2):
            g = u * 2 + v
            for oh in range(Ho):
                for ow in range(Wo):
                    ch, cw = 2 * oh + u, 2 * ow + v      # conv output pos in window
                    for kh in range(KH):
                        for kw in range(KW):
                            ih, iw = ch + kh - 1, cw + kw - 1
                            if 0 <= ih < H and 0 <= iw < W:
                                mats[g, ih, iw, :, oh, ow, :] = w[:, :, kh, kw].T
    return mats.reshape(4, H * W * Cin, Ho * Wo * Cout)


def _pad_cols(a, n):
    return np.pad(a, [(0, 0)] * (a.ndim - 1) + [(0, n - a.shape[-1])])


def pack_params(tp):
    (w_conv1, b_conv1, w_conv2, b_conv2,
     w_fc1, b_fc1, w_fc2, b_fc2) = (np.asarray(a, np.float32) for a in tp)

    # conv1: (4, 64, 320) -> pad each position's N to P1=384 -> concat -> (64, 4*P1).
    m1 = _conv_pool_matmul_weights(w_conv1, 8, 8)
    w1 = np.concatenate([_pad_cols(m1[g], P1) for g in range(4)], axis=1)
    b1 = _pad_cols(np.tile(b_conv1, 16)[None, :], P1)                 # (1, P1)

    # conv2: (4, 320, 80) -> pad K 320->P1 (zero rows matching a1's zero pad lanes),
    # pad each position's N to P2=128 -> concat -> (P1, 4*P2).
    m2 = _conv_pool_matmul_weights(w_conv2, 4, 4)
    w2 = np.concatenate(
        [np.pad(_pad_cols(m2[g], P2), ((0, P1 - m2.shape[1]), (0, 0)))
         for g in range(4)], axis=1)
    b2 = _pad_cols(np.tile(b_conv2, 4)[None, :], P2)                  # (1, P2)

    # fc1: kernel's flatten order is (h, w, c) over the first 4*C1 lanes; PyTorch NCHW
    # flatten is (c, h, w). Fold the permutation into the weight; pad K->P2, N->PH.
    fw1 = w_fc1.reshape(LW, C1, 2, 2)                                 # [j, c, h, w]
    fw1 = np.transpose(fw1, (2, 3, 1, 0)).reshape(4 * C1, LW)         # [(h,w,c), j]
    fw1 = np.pad(fw1, ((0, P2 - 4 * C1), (0, PH - LW)))               # (P2, PH)
    fb1 = _pad_cols(b_fc1[None, :], PH)                               # (1, PH)

    # fc2: pad K LW->PH with zero rows (h's pad lanes are exactly 0 anyway); keep N=10.
    fw2 = np.pad(w_fc2.T, ((0, PH - LW), (0, 0)))                     # (PH, 10)
    fb2 = b_fc2[None, :]                                              # (1, 10)

    return tuple(jnp.asarray(a) for a in (w1, b1, w2, b2, fw1, fb1, fw2, fb2))


# ------------------------ deterministic parameter init -------------------------

def init_torch_like_params(key):
    ks = jax.random.split(key, 8)
    w_conv1 = jax.random.normal(ks[0], (C1, 1, 3, 3), jnp.float32) * 0.2
    b_conv1 = jax.random.normal(ks[1], (C1,), jnp.float32) * 0.1
    w_conv2 = jax.random.normal(ks[2], (C1, C1, 3, 3), jnp.float32) * 0.1
    b_conv2 = jax.random.normal(ks[3], (C1,), jnp.float32) * 0.1
    w_fc1 = jax.random.normal(ks[4], (LW, C1 * 4), jnp.float32) * 0.1
    b_fc1 = jax.random.normal(ks[5], (LW,), jnp.float32) * 0.1
    w_fc2 = jax.random.normal(ks[6], (10, LW), jnp.float32) * 0.1
    b_fc2 = jax.random.normal(ks[7], (10,), jnp.float32) * 0.1
    return (w_conv1, b_conv1, w_conv2, b_conv2, w_fc1, b_fc1, w_fc2, b_fc2)


# ------------------------------ pure-JAX reference ------------------------------

def reference_forward(x, tp):
    w1, b1, w2, b2, fw1, fb1, fw2, fb2 = tp
    B = x.shape[0]
    dn = ('NCHW', 'OIHW', 'NCHW')
    a = x[:, None, :, :]
    a = lax.conv_general_dilated(a, w1, (1, 1), 'SAME', dimension_numbers=dn)
    a = a + b1[None, :, None, None]
    a = jnp.maximum(a.reshape(B, C1, 4, 2, 4, 2).max(axis=(3, 5)), 0.0)
    a = lax.conv_general_dilated(a, w2, (1, 1), 'SAME', dimension_numbers=dn)
    a = a + b2[None, :, None, None]
    a = jnp.maximum(a.reshape(B, C1, 2, 2, 2, 2).max(axis=(3, 5)), 0.0)
    a = a.reshape(B, C1 * 4)
    h = jnp.maximum(a @ fw1.T + fb1, 0.0)
    logits = h @ fw2.T + fb2
    return jax.nn.log_softmax(logits, axis=1)


# ----------------------------------- main ---------------------------------------

if __name__ == "__main__":
    key = jax.random.PRNGKey(0)
    kx, kp = jax.random.split(key)
    B = 8
    x = jax.random.uniform(kx, (B, 8, 8), jnp.float32) * 16.0   # sklearn-digits range

    torch_like = init_torch_like_params(kp)
    params = pack_params(torch_like)

    out = jax.jit(digits_forward)(x, params)
    out = jax.block_until_ready(out)

    ref = reference_forward(x, torch_like)
    assert out.shape == (B, 10)
    np.testing.assert_allclose(np.asarray(out), np.asarray(ref), rtol=1e-4, atol=1e-4)
    print("KERNEL_OK")
</pallas_src>

<mosaic_0001>
module attributes {stable_mosaic.version = 11 : i64} {
  func.func @_digits_fused_kernel(%arg0: i32, %arg1: memref<8x64xf32, #tpu.memory_space<vmem>>, %arg2: memref<64x1536xf32, #tpu.memory_space<vmem>>, %arg3: memref<1x384xf32, #tpu.memory_space<vmem>>, %arg4: memref<384x512xf32, #tpu.memory_space<vmem>>, %arg5: memref<1x128xf32, #tpu.memory_space<vmem>>, %arg6: memref<128x128xf32, #tpu.memory_space<vmem>>, %arg7: memref<1x128xf32, #tpu.memory_space<vmem>>, %arg8: memref<128x10xf32, #tpu.memory_space<vmem>>, %arg9: memref<1x10xf32, #tpu.memory_space<vmem>>, %arg10: memref<8x10xf32, #tpu.memory_space<vmem>>) attributes {dimension_semantics = [#tpu.dimension_semantics<parallel>], iteration_bounds = array<i64: 1>, scalar_prefetch = 0 : i64, scratch_operands = 0 : i64, tpu.core_type = #tpu.core_type<tc>, window_params = [{transform_indices = @transform_0, window_bounds = array<i64: 8, 64>}, {pipeline_mode = #tpu.pipeline_mode<synchronous>, transform_indices = @transform_1, window_bounds = array<i64: 64, 1536>}, {pipeline_mode = #tpu.pipeline_mode<synchronous>, transform_indices = @transform_2, window_bounds = array<i64: 1, 384>}, {pipeline_mode = #tpu.pipeline_mode<synchronous>, transform_indices = @transform_3, window_bounds = array<i64: 384, 512>}, {pipeline_mode = #tpu.pipeline_mode<synchronous>, transform_indices = @transform_4, window_bounds = array<i64: 1, 128>}, {pipeline_mode = #tpu.pipeline_mode<synchronous>, transform_indices = @transform_5, window_bounds = array<i64: 128, 128>}, {pipeline_mode = #tpu.pipeline_mode<synchronous>, transform_indices = @transform_6, window_bounds = array<i64: 1, 128>}, {pipeline_mode = #tpu.pipeline_mode<synchronous>, transform_indices = @transform_7, window_bounds = array<i64: 128, 10>}, {pipeline_mode = #tpu.pipeline_mode<synchronous>, transform_indices = @transform_8, window_bounds = array<i64: 1, 10>}, {transform_indices = @transform_9, window_bounds = array<i64: 8, 10>}]} {
    %c0 = arith.constant 0 : index
    %c0_0 = arith.constant 0 : index
    %0 = vector.load %arg1[%c0, %c0_0] : memref<8x64xf32, #tpu.memory_space<vmem>>, vector<8x64xf32>
    %c0_1 = arith.constant 0 : index
    %c0_2 = arith.constant 0 : index
    %1 = vector.load %arg2[%c0_1, %c0_2] : memref<64x1536xf32, #tpu.memory_space<vmem>>, vector<64x1536xf32>
    %cst = arith.constant dense<0.000000e+00> : vector<8x1536xf32>
    %2 = tpu.matmul %0, %1, %cst {dimension_numbers = #tpu.dot_dimension_numbers<[1], [0], [0], [1], [0, 0, 1, 1], [], []>} : vector<8x64xf32>, vector<64x1536xf32>, vector<8x1536xf32> -> vector<8x1536xf32>
    %3 = vector.extract_strided_slice %2 {offsets = [0, 0], sizes = [8, 384], strides = [1, 1]} : vector<8x1536xf32> to vector<8x384xf32>
    %4 = vector.extract_strided_slice %2 {offsets = [0, 384], sizes = [8, 384], strides = [1, 1]} : vector<8x1536xf32> to vector<8x384xf32>
    %5 = arith.maximumf %3, %4 : vector<8x384xf32>
    %6 = vector.extract_strided_slice %2 {offsets = [0, 768], sizes = [8, 384], strides = [1, 1]} : vector<8x1536xf32> to vector<8x384xf32>
    %7 = vector.extract_strided_slice %2 {offsets = [0, 1152], sizes = [8, 384], strides = [1, 1]} : vector<8x1536xf32> to vector<8x384xf32>
    %8 = arith.maximumf %6, %7 : vector<8x384xf32>
    %9 = arith.maximumf %5, %8 : vector<8x384xf32>
    %c0_3 = arith.constant 0 : index
    %c0_4 = arith.constant 0 : index
    %10 = vector.load %arg3[%c0_3, %c0_4] : memref<1x384xf32, #tpu.memory_space<vmem>>, vector<1x384xf32>
    %11 = vector.broadcast %10 : vector<1x384xf32> to vector<8x384xf32>
    %12 = arith.addf %9, %11 : vector<8x384xf32>
    %cst_5 = arith.constant 0.000000e+00 : f32
    %13 = vector.broadcast %cst_5 : f32 to vector<8x384xf32>
    %14 = arith.maximumf %12, %13 : vector<8x384xf32>
    %c0_6 = arith.constant 0 : index
    %c0_7 = arith.constant 0 : index
    %15 = vector.load %arg4[%c0_6, %c0_7] : memref<384x512xf32, #tpu.memory_space<vmem>>, vector<384x512xf32>
    %cst_8 = arith.constant dense<0.000000e+00> : vector<8x512xf32>
    %16 = tpu.matmul %14, %15, %cst_8 {dimension_numbers = #tpu.dot_dimension_numbers<[1], [0], [0], [1], [0, 0, 1, 1], [], []>} : vector<8x384xf32>, vector<384x512xf32>, vector<8x512xf32> -> vector<8x512xf32>
    %17 = vector.extract_strided_slice %16 {offsets = [0, 0], sizes = [8, 128], strides = [1, 1]} : vector<8x512xf32> to vector<8x128xf32>
    %18 = vector.extract_strided_slice %16 {offsets = [0, 128], sizes = [8, 128], strides = [1, 1]} : vector<8x512xf32> to vector<8x128xf32>
    %19 = arith.maximumf %17, %18 : vector<8x128xf32>
    %20 = vector.extract_strided_slice %16 {offsets = [0, 256], sizes = [8, 128], strides = [1, 1]} : vector<8x512xf32> to vector<8x128xf32>
    %21 = vector.extract_strided_slice %16 {offsets = [0, 384], sizes = [8, 128], strides = [1, 1]} : vector<8x512xf32> to vector<8x128xf32>
    %22 = arith.maximumf %20, %21 : vector<8x128xf32>
    %23 = arith.maximumf %19, %22 : vector<8x128xf32>
    %c0_9 = arith.constant 0 : index
    %c0_10 = arith.constant 0 : index
    %24 = vector.load %arg5[%c0_9, %c0_10] : memref<1x128xf32, #tpu.memory_space<vmem>>, vector<1x128xf32>
    %25 = vector.broadcast %24 : vector<1x128xf32> to vector<8x128xf32>
    %26 = arith.addf %23, %25 : vector<8x128xf32>
    %cst_11 = arith.constant 0.000000e+00 : f32
    %27 = vector.broadcast %cst_11 : f32 to vector<8x128xf32>
    %28 = arith.maximumf %26, %27 : vector<8x128xf32>
    %c0_12 = arith.constant 0 : index
    %c0_13 = arith.constant 0 : index
    %29 = vector.load %arg6[%c0_12, %c0_13] : memref<128x128xf32, #tpu.memory_space<vmem>>, vector<128x128xf32>
    %cst_14 = arith.constant dense<0.000000e+00> : vector<8x128xf32>
    %30 = tpu.matmul %28, %29, %cst_14 {dimension_numbers = #tpu.dot_dimension_numbers<[1], [0], [0], [1], [0, 0, 1, 1], [], []>} : vector<8x128xf32>, vector<128x128xf32>, vector<8x128xf32> -> vector<8x128xf32>
    %c0_15 = arith.constant 0 : index
    %c0_16 = arith.constant 0 : index
    %31 = vector.load %arg7[%c0_15, %c0_16] : memref<1x128xf32, #tpu.memory_space<vmem>>, vector<1x128xf32>
    %32 = vector.broadcast %31 : vector<1x128xf32> to vector<8x128xf32>
    %33 = arith.addf %30, %32 : vector<8x128xf32>
    %cst_17 = arith.constant 0.000000e+00 : f32
    %34 = vector.broadcast %cst_17 : f32 to vector<8x128xf32>
    %35 = arith.maximumf %33, %34 : vector<8x128xf32>
    %c0_18 = arith.constant 0 : index
    %c0_19 = arith.constant 0 : index
    %36 = vector.load %arg8[%c0_18, %c0_19] : memref<128x10xf32, #tpu.memory_space<vmem>>, vector<128x10xf32>
    %cst_20 = arith.constant dense<0.000000e+00> : vector<8x10xf32>
    %37 = tpu.matmul %35, %36, %cst_20 {dimension_numbers = #tpu.dot_dimension_numbers<[1], [0], [0], [1], [0, 0, 1, 1], [], []>} : vector<8x128xf32>, vector<128x10xf32>, vector<8x10xf32> -> vector<8x10xf32>
    %c0_21 = arith.constant 0 : index
    %c0_22 = arith.constant 0 : index
    %38 = vector.load %arg9[%c0_21, %c0_22] : memref<1x10xf32, #tpu.memory_space<vmem>>, vector<1x10xf32>
    %39 = vector.broadcast %38 : vector<1x10xf32> to vector<8x10xf32>
    %40 = arith.addf %37, %39 : vector<8x10xf32>
    %cst_23 = arith.constant dense<0xFF800000> : vector<8xf32>
    %41 = vector.multi_reduction <maximumf>, %40, %cst_23 [1] : vector<8x10xf32> to vector<8xf32>
    %42 = vector.shape_cast %41 : vector<8xf32> to vector<8x1xf32>
    %43 = vector.broadcast %42 : vector<8x1xf32> to vector<8x10xf32>
    %44 = arith.subf %40, %43 : vector<8x10xf32>
    %45 = math.exp %44 : vector<8x10xf32>
    %cst_24 = arith.constant dense<0.000000e+00> : vector<8xf32>
    %46 = vector.multi_reduction <add>, %45, %cst_24 [1] : vector<8x10xf32> to vector<8xf32>
    %47 = vector.shape_cast %46 : vector<8xf32> to vector<8x1xf32>
    %48 = math.log %47 : vector<8x1xf32>
    %49 = vector.broadcast %48 : vector<8x1xf32> to vector<8x10xf32>
    %50 = arith.subf %44, %49 : vector<8x10xf32>
    %c0_25 = arith.constant 0 : index
    %c0_26 = arith.constant 0 : index
    %51 = vector.load %arg10[%c0_25, %c0_26] : memref<8x10xf32, #tpu.memory_space<vmem>>, vector<8x10xf32>
    tpu.vector_store %arg10[%c0_25, %c0_26], %50 {strides = array<i32>} : memref<8x10xf32, #tpu.memory_space<vmem>>, vector<8x10xf32>,
    return
  }
  func.func @transform_0(%arg0: i32) -> (i32, i32) {
    %c0_i32 = arith.constant 0 : i32
    %c0_i32_0 = arith.constant 0 : i32
    return %arg0, %c0_i32 : i32, i32
  }
  func.func @transform_1(%arg0: i32) -> (i32, i32) {
    %c0_i32 = arith.constant 0 : i32
    %c0_i32_0 = arith.constant 0 : i32
    %c0_i32_1 = arith.constant 0 : i32
    return %c0_i32, %c0_i32_0 : i32, i32
  }
  func.func @transform_2(%arg0: i32) -> (i32, i32) {
    %c0_i32 = arith.constant 0 : i32
    %c0_i32_0 = arith.constant 0 : i32
    %c0_i32_1 = arith.constant 0 : i32
    return %c0_i32, %c0_i32_0 : i32, i32
  }
  func.func @transform_3(%arg0: i32) -> (i32, i32) {
    %c0_i32 = arith.constant 0 : i32
    %c0_i32_0 = arith.constant 0 : i32
    %c0_i32_1 = arith.constant 0 : i32
    return %c0_i32, %c0_i32_0 : i32, i32
  }
  func.func @transform_4(%arg0: i32) -> (i32, i32) {
    %c0_i32 = arith.constant 0 : i32
    %c0_i32_0 = arith.constant 0 : i32
    %c0_i32_1 = arith.constant 0 : i32
    return %c0_i32, %c0_i32_0 : i32, i32
  }
  func.func @transform_5(%arg0: i32) -> (i32, i32) {
    %c0_i32 = arith.constant 0 : i32
    %c0_i32_0 = arith.constant 0 : i32
    %c0_i32_1 = arith.constant 0 : i32
    return %c0_i32, %c0_i32_0 : i32, i32
  }
  func.func @transform_6(%arg0: i32) -> (i32, i32) {
    %c0_i32 = arith.constant 0 : i32
    %c0_i32_0 = arith.constant 0 : i32
    %c0_i32_1 = arith.constant 0 : i32
    return %c0_i32, %c0_i32_0 : i32, i32
  }
  func.func @transform_7(%arg0: i32) -> (i32, i32) {
    %c0_i32 = arith.constant 0 : i32
    %c0_i32_0 = arith.constant 0 : i32
    %c0_i32_1 = arith.constant 0 : i32
    return %c0_i32, %c0_i32_0 : i32, i32
  }
  func.func @transform_8(%arg0: i32) -> (i32, i32) {
    %c0_i32 = arith.constant 0 : i32
    %c0_i32_0 = arith.constant 0 : i32
    %c0_i32_1 = arith.constant 0 : i32
    return %c0_i32, %c0_i32_0 : i32, i32
  }
  func.func @transform_9(%arg0: i32) -> (i32, i32) {
    %c0_i32 = arith.constant 0 : i32
    %c0_i32_0 = arith.constant 0 : i32
    return %arg0, %c0_i32 : i32, i32
  }
}

</mosaic_0001>

<llo_original>
// kernel: digits_forward.1
$region0: #{digits_forward.1}
  #allocation0 [shape = 'u32[]', space=smem, size = 0x4, offset = 0x4, fixed_abs, tag = 'smem constant byte address 0x4 - core index']
  #allocation1 [shape = 'u32[144,128]{1,0:T(1,128)}', space=vmem, size = 0x12000, scoped, tag = 'internal scratch']
  %s0 = inlined_call_operand.vmem [shape: f32[8,64], index: 0, kind: input, shape index: {}]
  %s1 = inlined_call_operand.hbm [shape: f32[64,1536], index: 1, kind: input, shape index: {}]
  %s2 = inlined_call_operand.vmem [shape: f32[1,384], index: 2, kind: input, shape index: {}]
  %s3 = inlined_call_operand.hbm [shape: f32[384,512], index: 3, kind: input, shape index: {}]
  %s4 = inlined_call_operand.vmem [shape: f32[1,128], index: 4, kind: input, shape index: {}]
  %s5 = inlined_call_operand.vmem [shape: f32[128,128], index: 5, kind: input, shape index: {}]
  %s6 = inlined_call_operand.vmem [shape: f32[1,128], index: 6, kind: input, shape index: {}]
  %s7 = inlined_call_operand.vmem [shape: f32[128,10], index: 7, kind: input, shape index: {}]
  %s8 = inlined_call_operand.vmem [shape: f32[1,10], index: 8, kind: input, shape index: {}]
  %s9 = inlined_call_operand.hbm [shape: f32[8,10], index: 9, kind: output, shape index: {}]
  %s10 = sld [smem:[#allocation0]]
  $region54: #{digits_forward.1} parent=0
    _
  %s12 = ssub.s32 1, %s10
  %s13 = scalar_select 0, %s12, %s10
  $region1: #{digits_forward.1} parent=0
    #allocation2 [shape = 'u8[393216]{0}', space=vmem, size = 0x60000, scoped, tag = 'input window, operand 1, single buffered']
    #allocation3 [shape = 's32[1]{0}', space=sflag, size = 0x4, scoped, tag = 'scoped memory for digits_forward.1']
    #allocation4 [shape = 's32[1]{0}', space=sflag, size = 0x4, scoped, tag = 'scoped memory for digits_forward.1']
    #allocation5 [shape = 'u8[786432]{0}', space=vmem, size = 0xc0000, scoped, tag = 'input window, operand 3, single buffered']
    #allocation6 [shape = 's32[1]{0}', space=sflag, size = 0x4, scoped, tag = 'scoped memory for digits_forward.1']
    #allocation7 [shape = 'u8[4096]{0}', space=vmem, size = 0x1000, scoped, tag = 'output window, operand 0, single buffered']
    %14 = vsyncpa [#allocation3], 0
    %15 = vsyncpa [#allocation6], 0
    %16 = vsyncpa [#allocation4], 0
    // Predicated region
    $region2: #{digits_forward.1} parent=1 // pred_check
      _
    $region3: #{digits_forward.1} parent=1 // pred_check_branch
      %18 = sbr.rel (0) target = $region5
    $region4: #{digits_forward.1} parent=1 // pred_region
      _
    $region5: #{digits_forward.1} parent=1 // pred_fallthru
      _
    // Predicated region
    $region6: #{digits_forward.1} parent=1 // pred_check
      _
    $region7: #{digits_forward.1} parent=1 // pred_check_branch
      %20 = sbr.rel (0) target = $region9
    $region8: #{digits_forward.1} parent=1 // pred_region
      %s22 = ssub.s32 12288, 12288
      %23 = vsyncadd [#allocation3], %s22
      %s24 = sshll.u32 [#allocation2], 4
      %s25 = int_to_ptr.vmem [resolvable:$true] %s24
      %30 = dma.hbm_to_vmem [thread:$0]  %s1, 12288, %s25, [#allocation3], 1536, 1536, 96
    $region9: #{digits_forward.1} parent=1 // pred_fallthru
      _
    // Predicated region
    $region10: #{digits_forward.1} parent=1 // pred_check
      _
    $region11: #{digits_forward.1} parent=1 // pred_check_branch
      %32 = sbr.rel (0) target = $region13
    $region12: #{digits_forward.1} parent=1 // pred_region
      _
    $region13: #{digits_forward.1} parent=1 // pred_fallthru
      _
    // Predicated region
    $region14: #{digits_forward.1} parent=1 // pred_check
      _
    $region15: #{digits_forward.1} parent=1 // pred_check_branch
      %34 = sbr.rel (0) target = $region17
    $region16: #{digits_forward.1} parent=1 // pred_region
      %s36 = ssub.s32 24576, 24576
      %37 = vsyncadd [#allocation6], %s36
      %s38 = sshll.u32 [#allocation5], 4
      %s39 = int_to_ptr.vmem [resolvable:$true] %s38
      %44 = dma.hbm_to_vmem [thread:$0]  %s3, 24576, %s39, [#allocation6], 512, 512, 32
    $region17: #{digits_forward.1} parent=1 // pred_fallthru
      _
    // Predicated region
    $region18: #{digits_forward.1} parent=1 // pred_check
      _
    $region19: #{digits_forward.1} parent=1 // pred_check_branch
      %46 = sbr.rel (0) target = $region21
    $region20: #{digits_forward.1} parent=1 // pred_region
      _
    $region21: #{digits_forward.1} parent=1 // pred_fallthru
      _
    // Predicated region
    $region22: #{digits_forward.1} parent=1 // pred_check
      _
    $region23: #{digits_forward.1} parent=1 // pred_check_branch
      %48 = sbr.rel (0) target = $region25
    $region24: #{digits_forward.1} parent=1 // pred_region
      _
    $region25: #{digits_forward.1} parent=1 // pred_fallthru
      _
    // Predicated region
    $region26: #{digits_forward.1} parent=1 // pred_check
      _
    $region27: #{digits_forward.1} parent=1 // pred_check_branch
      %50 = sbr.rel (0) target = $region29
    $region28: #{digits_forward.1} parent=1 // pred_region
      _
    $region29: #{digits_forward.1} parent=1 // pred_fallthru
      _
    // Predicated region
    $region30: #{digits_forward.1} parent=1 // pred_check
      _
    $region31: #{digits_forward.1} parent=1 // pred_check_branch
      %52 = sbr.rel (0) target = $region33
    $region32: #{digits_forward.1} parent=1 // pred_region
      _
    $region33: #{digits_forward.1} parent=1 // pred_fallthru
      _
    // Predicated region
    $region34: #{digits_forward.1} parent=1 // pred_check
      _
    $region35: #{digits_forward.1} parent=1 // pred_check_branch
      %54 = sbr.rel (0) target = $region37
    $region36: #{digits_forward.1} parent=1 // pred_region
      _
    $region37: #{digits_forward.1} parent=1 // pred_fallthru
      _
    // Predicated region
    $region38: #{digits_forward.1} parent=1 // pred_check
      _
    $region39: #{digits_forward.1} parent=1 // pred_check_branch
      %56 = sbr.rel (0) target = $region41
    $region40: #{digits_forward.1} parent=1 // pred_region
      %57 = dma.done [#allocation3], 12288
    $region41: #{digits_forward.1} parent=1 // pred_fallthru
      _
    // Predicated region
    $region42: #{digits_forward.1} parent=1 // pred_check
      _
    $region43: #{digits_forward.1} parent=1 // pred_check_branch
      %59 = sbr.rel (0) target = $region45
    $region44: #{digits_forward.1} parent=1 // pred_region
      %60 = dma.done [#allocation6], 24576
    $region45: #{digits_forward.1} parent=1 // pred_fallthru
      _
    %v61 = vld [vmem:[%s0] sm:$0xff]
    %v62 = vld [vmem:[#allocation2] sm:$0xff]
    %v63 = vld [vmem:[#allocation2 + $0x8] sm:$0xff]
    %v64 = vld [vmem:[#allocation2 + $0x10] sm:$0xff]
    %v65 = vld [vmem:[#allocation2 + $0x18] sm:$0xff]
    %v66 = vld [vmem:[#allocation2 + $0x20] sm:$0xff]
    %v67 = vld [vmem:[#allocation2 + $0x28] sm:$0xff]
    %v68 = vld [vmem:[#allocation2 + $0x30] sm:$0xff]
    %v69 = vld [vmem:[#allocation2 + $0x38] sm:$0xff]
    %v70 = vld [vmem:[#allocation2 + $0x40] sm:$0xff]
    %v71 = vld [vmem:[#allocation2 + $0x48] sm:$0xff]
    %v72 = vld [vmem:[#allocation2 + $0x50] sm:$0xff]
    %v73 = vld [vmem:[#allocation2 + $0x58] sm:$0xff]
    %v74 = vld [vmem:[#allocation2 + $0x60] sm:$0xff]
    %v75 = vld [vmem:[#allocation2 + $0x68] sm:$0xff]
    %v76 = vld [vmem:[#allocation2 + $0x70] sm:$0xff]
    %v77 = vld [vmem:[#allocation2 + $0x78] sm:$0xff]
    %v78 = vld [vmem:[#allocation2 + $0x80] sm:$0xff]
    %v79 = vld [vmem:[#allocation2 + $0x88] sm:$0xff]
    %v80 = vld [vmem:[#allocation2 + $0x90] sm:$0xff]
    %v81 = vld [vmem:[#allocation2 + $0x98] sm:$0xff]
    %v82 = vld [vmem:[#allocation2 + $0xa0] sm:$0xff]
    %v83 = vld [vmem:[#allocation2 + $0xa8] sm:$0xff]
    %v84 = vld [vmem:[#allocation2 + $0xb0] sm:$0xff]
    %v85 = vld [vmem:[#allocation2 + $0xb8] sm:$0xff]
    %v86 = vld [vmem:[#allocation2 + $0xc0] sm:$0xff]
    %v87 = vld [vmem:[#allocation2 + $0xc8] sm:$0xff]
    %v88 = vld [vmem:[#allocation2 + $0xd0] sm:$0xff]
    %v89 = vld [vmem:[#allocation2 + $0xd8] sm:$0xff]
    %v90 = vld [vmem:[#allocation2 + $0xe0] sm:$0xff]
    %v91 = vld [vmem:[#allocation2 + $0xe8] sm:$0xff]
    %v92 = vld [vmem:[#allocation2 + $0xf0] sm:$0xff]
    %v93 = vld [vmem:[#allocation2 + $0xf8] sm:$0xff]
    %v94 = vld [vmem:[#allocation2 + $0x100] sm:$0xff]
    %v95 = vld [vmem:[#allocation2 + $0x108] sm:$0xff]
    %v96 = vld [vmem:[#allocation2 + $0x110] sm:$0xff]
    %v97 = vld [vmem:[#allocation2 + $0x118] sm:$0xff]
    %v98 = vld [vmem:[#allocation2 + $0x120] sm:$0xff]
    %v99 = vld [vmem:[#allocation2 + $0x128] sm:$0xff]
    %v100 = vld [vmem:[#allocation2 + $0x130] sm:$0xff]
    %v101 = vld [vmem:[#allocation2 + $0x138] sm:$0xff]
    %v102 = vld [vmem:[#allocation2 + $0x140] sm:$0xff]
    %v103 = vld [vmem:[#allocation2 + $0x148] sm:$0xff]
    %v104 = vld [vmem:[#allocation2 + $0x150] sm:$0xff]
    %v105 = vld [vmem:[#allocation2 + $0x158] sm:$0xff]
    %v106 = vld [vmem:[#allocation2 + $0x160] sm:$0xff]
    %v107 = vld [vmem:[#allocation2 + $0x168] sm:$0xff]
    %v108 = vld [vmem:[#allocation2 + $0x170] sm:$0xff]
    %v109 = vld [vmem:[#allocation2 + $0x178] sm:$0xff]
    %v110 = vld [vmem:[#allocation2 + $0x180] sm:$0xff]
    %v111 = vld [vmem:[#allocation2 + $0x188] sm:$0xff]
    %v112 = vld [vmem:[#allocation2 + $0x190] sm:$0xff]
    %v113 = vld [vmem:[#allocation2 + $0x198] sm:$0xff]
    %v114 = vld [vmem:[#allocation2 + $0x1a0] sm:$0xff]
    %v115 = vld [vmem:[#allocation2 + $0x1a8] sm:$0xff]
    %v116 = vld [vmem:[#allocation2 + $0x1b0] sm:$0xff]
    %v117 = vld [vmem:[#allocation2 + $0x1b8] sm:$0xff]
    %v118 = vld [vmem:[#allocation2 + $0x1c0] sm:$0xff]
    %v119 = vld [vmem:[#allocation2 + $0x1c8] sm:$0xff]
    %v120 = vld [vmem:[#allocation2 + $0x1d0] sm:$0xff]
    %v121 = vld [vmem:[#allocation2 + $0x1d8] sm:$0xff]
    %v122 = vld [vmem:[#allocation2 + $0x1e0] sm:$0xff]
    %v123 = vld [vmem:[#allocation2 + $0x1e8] sm:$0xff]
    %v124 = vld [vmem:[#allocation2 + $0x1f0] sm:$0xff]
    %v125 = vld [vmem:[#allocation2 + $0x1f8] sm:$0xff]
    %v126 = vld [vmem:[#allocation2 + $0x200] sm:$0xff]
    %v127 = vld [vmem:[#allocation2 + $0x208] sm:$0xff]
    %v128 = vld [vmem:[#allocation2 + $0x210] sm:$0xff]
    %v129 = vld [vmem:[#allocation2 + $0x218] sm:$0xff]
    %v130 = vld [vmem:[#allocation2 + $0x220] sm:$0xff]
    %v131 = vld [vmem:[#allocation2 + $0x228] sm:$0xff]
    %v132 = vld [vmem:[#allocation2 + $0x230] sm:$0xff]
    %v133 = vld [vmem:[#allocation2 + $0x238] sm:$0xff]
    %v134 = vld [vmem:[#allocation2 + $0x240] sm:$0xff]
    %v135 = vld [vmem:[#allocation2 + $0x248] sm:$0xff]
    %v136 = vld [vmem:[#allocation2 + $0x250] sm:$0xff]
    %v137 = vld [vmem:[#allocation2 + $0x258] sm:$0xff]
    %v138 = vld [vmem:[#allocation2 + $0x260] sm:$0xff]
    %v139 = vld [vmem:[#allocation2 + $0x268] sm:$0xff]
    %v140 = vld [vmem:[#allocation2 + $0x270] sm:$0xff]
    %v141 = vld [vmem:[#allocation2 + $0x278] sm:$0xff]
    %v142 = vld [vmem:[#allocation2 + $0x280] sm:$0xff]
    %v143 = vld [vmem:[#allocation2 + $0x288] sm:$0xff]
    %v144 = vld [vmem:[#allocation2 + $0x290] sm:$0xff]
    %v145 = vld [vmem:[#allocation2 + $0x298] sm:$0xff]
    %v146 = vld [vmem:[#allocation2 + $0x2a0] sm:$0xff]
    %v147 = vld [vmem:[#allocation2 + $0x2a8] sm:$0xff]
    %v148 = vld [vmem:[#allocation2 + $0x2b0] sm:$0xff]
    %v149 = vld [vmem:[#allocation2 + $0x2b8] sm:$0xff]
    %v150 = vld [vmem:[#allocation2 + $0x2c0] sm:$0xff]
    %v151 = vld [vmem:[#allocation2 + $0x2c8] sm:$0xff]
    %v152 = vld [vmem:[#allocation2 + $0x2d0] sm:$0xff]
    %v153 = vld [vmem:[#allocation2 + $0x2d8] sm:$0xff]
    %v154 = vld [vmem:[#allocation2 + $0x2e0] sm:$0xff]
    %v155 = vld [vmem:[#allocation2 + $0x2e8] sm:$0xff]
    %v156 = vld [vmem:[#allocation2 + $0x2f0] sm:$0xff]
    %v157 = vld [vmem:[#allocation2 + $0x2f8] sm:$0xff]
    %vm158 = vcmask 523264
    %v160 = vsel %vm158, %v61, 0
    %162 = vmatprep.subr.mxu0 %v63
    %163 = vmatpush1.msra.mxu0 %v62
    %164 = vmatprep.subr.mxu0 %v75
    %165 = vmatpush1.msra.mxu0 %v74
    %166 = vmatprep.subr.mxu0 %v87
    %167 = vmatpush1.msra.mxu0 %v86
    %168 = vmatprep.subr.mxu0 %v99
    %169 = vmatpush1.msra.mxu0 %v98
    %170 = vmatprep.subr.mxu0 %v111
    %171 = vmatpush1.msra.mxu0 %v110
    %172 = vmatprep.subr.mxu0 %v123
    %173 = vmatpush1.msra.mxu0 %v122
    %174 = vmatprep.subr.mxu0 %v135
    %175 = vmatpush1.msra.mxu0 %v134
    %176 = vmatprep.subr.mxu0 %v147
    %177 = vmatpush1.msra.mxu0 %v146
    %178 = vmatprep.subr.mxu0 0.0
    %179 = vmatpush1.msra.mxu0 0.0
    %180 = vmatprep.subr.mxu0 0.0
    %181 = vmatpush1.msra.mxu0 0.0
    %182 = vmatprep.subr.mxu0 0.0
    %183 = vmatpush1.msra.mxu0 0.0
    %184 = vmatprep.subr.mxu0 0.0
    %185 = vmatpush1.msra.mxu0 0.0
    %186 = vmatprep.subr.mxu0 0.0
    %187 = vmatpush1.msra.mxu0 0.0
    %188 = vmatprep.subr.mxu0 0.0
    %189 = vmatpush1.msra.mxu0 0.0
    %190 = vmatprep.subr.mxu0 0.0
    %191 = vmatpush1.msra.mxu0 0.0
    %192 = vmatprep.subr.mxu0 0.0
    %193 = vmatpush1.msra.mxu0 0.0
    %194 = vmatprep.subr.mxu0 0.0
    %195 = vmatpush1.msra.mxu0 0.0
    %196 = vmatprep.subr.mxu0 0.0
    %197 = vmatpush1.msra.mxu0 0.0
    %198 = vmatprep.subr.mxu0 0.0
    %199 = vmatpush1.msra.mxu0 0.0
    %200 = vmatprep.subr.mxu0 0.0
    %201 = vmatpush1.msra.mxu0 0.0
    %202 = vmatprep.subr.mxu0 0.0
    %203 = vmatpush1.msra.mxu0 0.0
    %204 = vmatprep.subr.mxu0 0.0
    %205 = vmatpush1.msra.mxu0 0.0
    %206 = vmatprep.subr.mxu0 0.0
    %207 = vmatpush1.msra.mxu0 0.0
    %208 = vmatprep.subr.mxu0 0.0
    %209 = vmatpush1.msra.mxu0 0.0
    %210 = vmatprep.subr.mxu0 0.0
    %211 = vmatpush1.msra.mxu0 0.0
    %212 = vmatprep.subr.mxu0 0.0
    %213 = vmatpush1.msra.mxu0 0.0
    %214 = vmatprep.subr.mxu0 0.0
    %215 = vmatpush1.msra.mxu0 0.0
    %216 = vmatprep.subr.mxu0 0.0
    %217 = vmatpush1.msra.mxu0 0.0
    %218 = vmatprep.subr.mxu0 0.0
    %219 = vmatpush1.msra.mxu0 0.0
    %220 = vmatprep.subr.mxu0 0.0
    %221 = vmatpush1.msra.mxu0 0.0
    %222 = vmatprep.subr.mxu0 0.0
    %223 = vmatpush1.msra.mxu0 0.0
    %224 = vmatprep.subr.mxu0 0.0
    %225 = vmatpush1.msra.mxu0 0.0
    %226 = vmatprep.mubr.f32.mxu0 0.0
    %227 = vmatmul.mubr.f32.gmra.mrb[0].mxu0 %v160
    %v228 = vpop.f32.mrb[0].mxu0
    %v229 = vadd.f32 0.0, %v228
    %v230 = vpop.f32.mrb[0].mxu0
    %v231 = vadd.f32 0.0, %v230
    %232 = vdwg.mxu0
    %233 = vmatprep.subr.mxu0 %v65
    %234 = vmatpush1.msra.mxu0 %v64
    %235 = vmatprep.subr.mxu0 %v77
    %236 = vmatpush1.msra.mxu0 %v76
    %237 = vmatprep.subr.mxu0 %v89
    %238 = vmatpush1.msra.mxu0 %v88
    %239 = vmatprep.subr.mxu0 %v101
    %240 = vmatpush1.msra.mxu0 %v100
    %241 = vmatprep.subr.mxu0 %v113
    %242 = vmatpush1.msra.mxu0 %v112
    %243 = vmatprep.subr.mxu0 %v125
    %244 = vmatpush1.msra.mxu0 %v124
    %245 = vmatprep.subr.mxu0 %v137
    %246 = vmatpush1.msra.mxu0 %v136
    %247 = vmatprep.subr.mxu0 %v149
    %248 = vmatpush1.msra.mxu0 %v148
    %249 = vmatprep.subr.mxu0 0.0
    %250 = vmatpush1.msra.mxu0 0.0
    %251 = vmatprep.subr.mxu0 0.0
    %252 = vmatpush1.msra.mxu0 0.0
    %253 = vmatprep.subr.mxu0 0.0
    %254 = vmatpush1.msra.mxu0 0.0
    %255 = vmatprep.subr.mxu0 0.0
    %256 = vmatpush1.msra.mxu0 0.0
    %257 = vmatprep.subr.mxu0 0.0
    %258 = vmatpush1.msra.mxu0 0.0
    %259 = vmatprep.subr.mxu0 0.0
    %260 = vmatpush1.msra.mxu0 0.0
    %261 = vmatprep.subr.mxu0 0.0
    %262 = vmatpush1.msra.mxu0 0.0
    %263 = vmatprep.subr.mxu0 0.0
    %264 = vmatpush1.msra.mxu0 0.0
    %265 = vmatprep.subr.mxu0 0.0
    %266 = vmatpush1.msra.mxu0 0.0
    %267 = vmatprep.subr.mxu0 0.0
    %268 = vmatpush1.msra.mxu0 0.0
    %269 = vmatprep.subr.mxu0 0.0
    %270 = vmatpush1.msra.mxu0 0.0
    %271 = vmatprep.subr.mxu0 0.0
    %272 = vmatpush1.msra.mxu0 0.0
    %273 = vmatprep.subr.mxu0 0.0
    %274 = vmatpush1.msra.mxu0 0.0
    %275 = vmatprep.subr.mxu0 0.0
    %276 = vmatpush1.msra.mxu0 0.0
    %277 = vmatprep.subr.mxu0 0.0
    %278 = vmatpush1.msra.mxu0 0.0
    %279 = vmatprep.subr.mxu0 0.0
    %280 = vmatpush1.msra.mxu0 0.0
    %281 = vmatprep.subr.mxu0 0.0
    %282 = vmatpush1.msra.mxu0 0.0
    %283 = vmatprep.subr.mxu0 0.0
    %284 = vmatpush1.msra.mxu0 0.0
    %285 = vmatprep.subr.mxu0 0.0
    %286 = vmatpush1.msra.mxu0 0.0
    %287 = vmatprep.subr.mxu0 0.0
    %288 = vmatpush1.msra.mxu0 0.0
    %289 = vmatprep.subr.mxu0 0.0
    %290 = vmatpush1.msra.mxu0 0.0
    %291 = vmatprep.subr.mxu0 0.0
    %292 = vmatpush1.msra.mxu0 0.0
    %293 = vmatprep.subr.mxu0 0.0
    %294 = vmatpush1.msra.mxu0 0.0
    %295 = vmatprep.subr.mxu0 0.0
    %296 = vmatpush1.msra.mxu0 0.0
    %297 = vmatprep.mubr.f32.mxu0 0.0
    %298 = vmatmul.mubr.f32.gmra.mrb[0].mxu0 %v160
    %v299 = vpop.f32.mrb[0].mxu0
    %v300 = vadd.f32 0.0, %v299
    %v301 = vpop.f32.mrb[0].mxu0
    %v302 = vadd.f32 0.0, %v301
    %303 = vdwg.mxu0
    %304 = vmatprep.subr.mxu0 %v67
    %305 = vmatpush1.msra.mxu0 %v66
    %306 = vmatprep.subr.mxu0 %v79
    %307 = vmatpush1.msra.mxu0 %v78
    %308 = vmatprep.subr.mxu0 %v91
    %309 = vmatpush1.msra.mxu0 %v90
    %310 = vmatprep.subr.mxu0 %v103
    %311 = vmatpush1.msra.mxu0 %v102
    %312 = vmatprep.subr.mxu0 %v115
    %313 = vmatpush1.msra.mxu0 %v114
    %314 = vmatprep.subr.mxu0 %v127
    %315 = vmatpush1.msra.mxu0 %v126
    %316 = vmatprep.subr.mxu0 %v139
    %317 = vmatpush1.msra.mxu0 %v138
    %318 = vmatprep.subr.mxu0 %v151
    %319 = vmatpush1.msra.mxu0 %v150
    %320 = vmatprep.subr.mxu0 0.0
    %321 = vmatpush1.msra.mxu0 0.0
    %322 = vmatprep.subr.mxu0 0.0
    %323 = vmatpush1.msra.mxu0 0.0
    %324 = vmatprep.subr.mxu0 0.0
    %325 = vmatpush1.msra.mxu0 0.0
    %326 = vmatprep.subr.mxu0 0.0
    %327 = vmatpush1.msra.mxu0 0.0
    %328 = vmatprep.subr.mxu0 0.0
    %329 = vmatpush1.msra.mxu0 0.0
    %330 = vmatprep.subr.mxu0 0.0
    %331 = vmatpush1.msra.mxu0 0.0
    %332 = vmatprep.subr.mxu0 0.0
    %333 = vmatpush1.msra.mxu0 0.0
    %334 = vmatprep.subr.mxu0 0.0
    %335 = vmatpush1.msra.mxu0 0.0
    %336 = vmatprep.subr.mxu0 0.0
    %337 = vmatpush1.msra.mxu0 0.0
    %338 = vmatprep.subr.mxu0 0.0
    %339 = vmatpush1.msra.mxu0 0.0
    %340 = vmatprep.subr.mxu0 0.0
    %341 = vmatpush1.msra.mxu0 0.0
    %342 = vmatprep.subr.mxu0 0.0
    %343 = vmatpush1.msra.mxu0 0.0
    %344 = vmatprep.subr.mxu0 0.0
    %345 = vmatpush1.msra.mxu0 0.0
    %346 = vmatprep.subr.mxu0 0.0
    %347 = vmatpush1.msra.mxu0 0.0
    %348 = vmatprep.subr.mxu0 0.0
    %349 = vmatpush1.msra.mxu0 0.0
    %350 = vmatprep.subr.mxu0 0.0
    %351 = vmatpush1.msra.mxu0 0.0
    %352 = vmatprep.subr.mxu0 0.0
    %353 = vmatpush1.msra.mxu0 0.0
    %354 = vmatprep.subr.mxu0 0.0
    %355 = vmatpush1.msra.mxu0 0.0
    %356 = vmatprep.subr.mxu0 0.0
    %357 = vmatpush1.msra.mxu0 0.0
    %358 = vmatprep.subr.mxu0 0.0
    %359 = vmatpush1.msra.mxu0 0.0
    %360 = vmatprep.subr.mxu0 0.0
    %361 = vmatpush1.msra.mxu0 0.0
    %362 = vmatprep.subr.mxu0 0.0
    %363 = vmatpush1.msra.mxu0 0.0
    %364 = vmatprep.subr.mxu0 0.0
    %365 = vmatpush1.msra.mxu0 0.0
    %366 = vmatprep.subr.mxu0 0.0
    %367 = vmatpush1.msra.mxu0 0.0
    %368 = vmatprep.mubr.f32.mxu0 0.0
    %369 = vmatmul.mubr.f32.gmra.mrb[0].mxu0 %v160
    %v370 = vpop.f32.mrb[0].mxu0
    %v371 = vadd.f32 0.0, %v370
    %v372 = vpop.f32.mrb[0].mxu0
    %v373 = vadd.f32 0.0, %v372
    %374 = vdwg.mxu0
    %375 = vmatprep.subr.mxu0 %v69
    %376 = vmatpush1.msra.mxu0 %v68
    %377 = vmatprep.subr.mxu0 %v81
    %378 = vmatpush1.msra.mxu0 %v80
    %379 = vmatprep.subr.mxu0 %v93
    %380 = vmatpush1.msra.mxu0 %v92
    %381 = vmatprep.subr.mxu0 %v105
    %382 = vmatpush1.msra.mxu0 %v104
    %383 = vmatprep.subr.mxu0 %v117
    %384 = vmatpush1.msra.mxu0 %v116
    %385 = vmatprep.subr.mxu0 %v129
    %386 = vmatpush1.msra.mxu0 %v128
    %387 = vmatprep.subr.mxu0 %v141
    %388 = vmatpush1.msra.mxu0 %v140
    %389 = vmatprep.subr.mxu0 %v153
    %390 = vmatpush1.msra.mxu0 %v152
    %391 = vmatprep.subr.mxu0 0.0
    %392 = vmatpush1.msra.mxu0 0.0
    %393 = vmatprep.subr.mxu0 0.0
    %394 = vmatpush1.msra.mxu0 0.0
    %395 = vmatprep.subr.mxu0 0.0
    %396 = vmatpush1.msra.mxu0 0.0
    %397 = vmatprep.subr.mxu0 0.0
    %398 = vmatpush1.msra.mxu0 0.0
    %399 = vmatprep.subr.mxu0 0.0
    %400 = vmatpush1.msra.mxu0 0.0
    %401 = vmatprep.subr.mxu0 0.0
    %402 = vmatpush1.msra.mxu0 0.0
    %403 = vmatprep.subr.mxu0 0.0
    %404 = vmatpush1.msra.mxu0 0.0
    %405 = vmatprep.subr.mxu0 0.0
    %406 = vmatpush1.msra.mxu0 0.0
    %407 = vmatprep.subr.mxu0 0.0
    %408 = vmatpush1.msra.mxu0 0.0
    %409 = vmatprep.subr.mxu0 0.0
    %410 = vmatpush1.msra.mxu0 0.0
    %411 = vmatprep.subr.mxu0 0.0
    %412 = vmatpush1.msra.mxu0 0.0
    %413 = vmatprep.subr.mxu0 0.0
    %414 = vmatpush1.msra.mxu0 0.0
    %415 = vmatprep.subr.mxu0 0.0
    %416 = vmatpush1.msra.mxu0 0.0
    %417 = vmatprep.subr.mxu0 0.0
    %418 = vmatpush1.msra.mxu0 0.0
    %419 = vmatprep.subr.mxu0 0.0
    %420 = vmatpush1.msra.mxu0 0.0
    %421 = vmatprep.subr.mxu0 0.0
    %422 = vmatpush1.msra.mxu0 0.0
    %423 = vmatprep.subr.mxu0 0.0
    %424 = vmatpush1.msra.mxu0 0.0
    %425 = vmatprep.subr.mxu0 0.0
    %426 = vmatpush1.msra.mxu0 0.0
    %427 = vmatprep.subr.mxu0 0.0
    %428 = vmatpush1.msra.mxu0 0.0
    %429 = vmatprep.subr.mxu0 0.0
    %430 = vmatpush1.msra.mxu0 0.0
    %431 = vmatprep.subr.mxu0 0.0
    %432 = vmatpush1.msra.mxu0 0.0
    %433 = vmatprep.subr.mxu0 0.0
    %434 = vmatpush1.msra.mxu0 0.0
    %435 = vmatprep.subr.mxu0 0.0
    %436 = vmatpush1.msra.mxu0 0.0
    %437 = vmatprep.subr.mxu0 0.0
    %438 = vmatpush1.msra.mxu0 0.0
    %439 = vmatprep.mubr.f32.mxu0 0.0
    %440 = vmatmul.mubr.f32.gmra.mrb[0].mxu0 %v160
    %v441 = vpop.f32.mrb[0].mxu0
    %v442 = vadd.f32 0.0, %v441
    %v443 = vpop.f32.mrb[0].mxu0
    %v444 = vadd.f32 0.0, %v443
    %445 = vdwg.mxu0
    %446 = vmatprep.subr.mxu0 %v71
    %447 = vmatpush1.msra.mxu0 %v70
    %448 = vmatprep.subr.mxu0 %v83
    %449 = vmatpush1.msra.mxu0 %v82
    %450 = vmatprep.subr.mxu0 %v95
    %451 = vmatpush1.msra.mxu0 %v94
    %452 = vmatprep.subr.mxu0 %v107
    %453 = vmatpush1.msra.mxu0 %v106
    %454 = vmatprep.subr.mxu0 %v119
    %455 = vmatpush1.msra.mxu0 %v118
    %456 = vmatprep.subr.mxu0 %v131
    %457 = vmatpush1.msra.mxu0 %v130
    %458 = vmatprep.subr.mxu0 %v143
    %459 = vmatpush1.msra.mxu0 %v142
    %460 = vmatprep.subr.mxu0 %v155
    %461 = vmatpush1.msra.mxu0 %v154
    %462 = vmatprep.subr.mxu0 0.0
    %463 = vmatpush1.msra.mxu0 0.0
    %464 = vmatprep.subr.mxu0 0.0
    %465 = vmatpush1.msra.mxu0 0.0
    %466 = vmatprep.subr.mxu0 0.0
    %467 = vmatpush1.msra.mxu0 0.0
    %468 = vmatprep.subr.mxu0 0.0
    %469 = vmatpush1.msra.mxu0 0.0
    %470 = vmatprep.subr.mxu0 0.0
    %471 = vmatpush1.msra.mxu0 0.0
    %472 = vmatprep.subr.mxu0 0.0
    %473 = vmatpush1.msra.mxu0 0.0
    %474 = vmatprep.subr.mxu0 0.0
    %475 = vmatpush1.msra.mxu0 0.0
    %476 = vmatprep.subr.mxu0 0.0
    %477 = vmatpush1.msra.mxu0 0.0
    %478 = vmatprep.subr.mxu0 0.0
    %479 = vmatpush1.msra.mxu0 0.0
    %480 = vmatprep.subr.mxu0 0.0
    %481 = vmatpush1.msra.mxu0 0.0
    %482 = vmatprep.subr.mxu0 0.0
    %483 = vmatpush1.msra.mxu0 0.0
    %484 = vmatprep.subr.mxu0 0.0
    %485 = vmatpush1.msra.mxu0 0.0
    %486 = vmatprep.subr.mxu0 0.0
    %487 = vmatpush1.msra.mxu0 0.0
    %488 = vmatprep.subr.mxu0 0.0
    %489 = vmatpush1.msra.mxu0 0.0
    %490 = vmatprep.subr.mxu0 0.0
    %491 = vmatpush1.msra.mxu0 0.0
    %492 = vmatprep.subr.mxu0 0.0
    %493 = vmatpush1.msra.mxu0 0.0
    %494 = vmatprep.subr.mxu0 0.0
    %495 = vmatpush1.msra.mxu0 0.0
    %496 = vmatprep.subr.mxu0 0.0
    %497 = vmatpush1.msra.mxu0 0.0
    %498 = vmatprep.subr.mxu0 0.0
    %499 = vmatpush1.msra.mxu0 0.0
    %500 = vmatprep.subr.mxu0 0.0
    %501 = vmatpush1.msra.mxu0 0.0
    %502 = vmatprep.subr.mxu0 0.0
    %503 = vmatpush1.msra.mxu0 0.0
    %504 = vmatprep.subr.mxu0 0.0
    %505 = vmatpush1.msra.mxu0 0.0
    %506 = vmatprep.subr.mxu0 0.0
    %507 = vmatpush1.msra.mxu0 0.0
    %508 = vmatprep.subr.mxu0 0.0
    %509 = vmatpush1.msra.mxu0 0.0
    %510 = vmatprep.mubr.f32.mxu0 0.0
    %511 = vmatmul.mubr.f32.gmra.mrb[0].mxu0 %v160
    %v512 = vpop.f32.mrb[0].mxu0
    %v513 = vadd.f32 0.0, %v512
    %v514 = vpop.f32.mrb[0].mxu0
    %v515 = vadd.f32 0.0, %v514
    %516 = vdwg.mxu0
    %517 = vmatprep.subr.mxu0 %v73
    %518 = vmatpush1.msra.mxu0 %v72
    %519 = vmatprep.subr.mxu0 %v85
    %520 = vmatpush1.msra.mxu0 %v84
    %521 = vmatprep.subr.mxu0 %v97
    %522 = vmatpush1.msra.mxu0 %v96
    %523 = vmatprep.subr.mxu0 %v109
    %524 = vmatpush1.msra.mxu0 %v108
    %525 = vmatprep.subr.mxu0 %v121
    %526 = vmatpush1.msra.mxu0 %v120
    %527 = vmatprep.subr.mxu0 %v133
    %528 = vmatpush1.msra.mxu0 %v132
    %529 = vmatprep.subr.mxu0 %v145
    %530 = vmatpush1.msra.mxu0 %v144
    %531 = vmatprep.subr.mxu0 %v157
    %532 = vmatpush1.msra.mxu0 %v156
    %533 = vmatprep.subr.mxu0 0.0
    %534 = vmatpush1.msra.mxu0 0.0
    %535 = vmatprep.subr.mxu0 0.0
    %536 = vmatpush1.msra.mxu0 0.0
    %537 = vmatprep.subr.mxu0 0.0
    %538 = vmatpush1.msra.mxu0 0.0
    %539 = vmatprep.subr.mxu0 0.0
    %540 = vmatpush1.msra.mxu0 0.0
    %541 = vmatprep.subr.mxu0 0.0
    %542 = vmatpush1.msra.mxu0 0.0
    %543 = vmatprep.subr.mxu0 0.0
    %544 = vmatpush1.msra.mxu0 0.0
    %545 = vmatprep.subr.mxu0 0.0
    %546 = vmatpush1.msra.mxu0 0.0
    %547 = vmatprep.subr.mxu0 0.0
    %548 = vmatpush1.msra.mxu0 0.0
    %549 = vmatprep.subr.mxu0 0.0
    %550 = vmatpush1.msra.mxu0 0.0
    %551 = vmatprep.subr.mxu0 0.0
    %552 = vmatpush1.msra.mxu0 0.0
    %553 = vmatprep.subr.mxu0 0.0
    %554 = vmatpush1.msra.mxu0 0.0
    %555 = vmatprep.subr.mxu0 0.0
    %556 = vmatpush1.msra.mxu0 0.0
    %557 = vmatprep.subr.mxu0 0.0
    %558 = vmatpush1.msra.mxu0 0.0
    %559 = vmatprep.subr.mxu0 0.0
    %560 = vmatpush1.msra.mxu0 0.0
    %561 = vmatprep.subr.mxu0 0.0
    %562 = vmatpush1.msra.mxu0 0.0
    %563 = vmatprep.subr.mxu0 0.0
    %564 = vmatpush1.msra.mxu0 0.0
    %565 = vmatprep.subr.mxu0 0.0
    %566 = vmatpush1.msra.mxu0 0.0
    %567 = vmatprep.subr.mxu0 0.0
    %568 = vmatpush1.msra.mxu0 0.0
    %569 = vmatprep.subr.mxu0 0.0
    %570 = vmatpush1.msra.mxu0 0.0
    %571 = vmatprep.subr.mxu0 0.0
    %572 = vmatpush1.msra.mxu0 0.0
    %573 = vmatprep.subr.mxu0 0.0
    %574 = vmatpush1.msra.mxu0 0.0
    %575 = vmatprep.subr.mxu0 0.0
    %576 = vmatpush1.msra.mxu0 0.0
    %577 = vmatprep.subr.mxu0 0.0
    %578 = vmatpush1.msra.mxu0 0.0
    %579 = vmatprep.subr.mxu0 0.0
    %580 = vmatpush1.msra.mxu0 0.0
    %581 = vmatprep.mubr.f32.mxu0 0.0
    %582 = vmatmul.mubr.f32.gmra.mrb[0].mxu0 %v160
    %v583 = vpop.f32.mrb[0].mxu0
    %v584 = vadd.f32 0.0, %v583
    %v585 = vpop.f32.mrb[0].mxu0
    %v586 = vadd.f32 0.0, %v585
    %587 = vdwg.mxu0
    %v588 = vmax.f32 %v229, %v302
    %v589 = vmax.f32 %v231, %v371
    %v590 = vmax.f32 %v300, %v373
    %v591 = vmax.f32 %v442, %v515
    %v592 = vmax.f32 %v444, %v584
    %v593 = vmax.f32 %v513, %v586
    %v594 = vmax.f32 %v588, %v591
    %v595 = vmax.f32 %v589, %v592
    %v596 = vmax.f32 %v590, %v593
    %v597 = vld [vmem:[%s2] sm:$0x7]
    %v599 = vlaneseq
    %v600 = vshrl.u32 %v599, 7
    %v601 = vsub.s32 0, %v600
    %v602 = vrot.slane %v597, %v601
    %v603 = vlaneseq
    %v604 = vshrl.u32 %v603, 7
    %v605 = vsub.s32 1, %v604
    %v606 = vrot.slane %v597, %v605
    %v607 = vlaneseq
    %v608 = vshrl.u32 %v607, 7
    %v609 = vsub.s32 2, %v608
    %v610 = vrot.slane %v597, %v609
    %v614 = vadd.f32 %v594, %v602
    %v615 = vadd.f32 %v595, %v606
    %v616 = vadd.f32 %v596, %v610
    %v617 = vmax.f32 %v614, 0.0
    %v618 = vmax.f32 %v615, 0.0
    %v619 = vmax.f32 %v616, 0.0
    %v620 = vld [vmem:[#allocation5] sm:$0xff]
    %v621 = vld [vmem:[#allocation5 + $0x8] sm:$0xff]
    %v622 = vld [vmem:[#allocation5 + $0x10] sm:$0xff]
    %v623 = vld [vmem:[#allocation5 + $0x18] sm:$0xff]
    %v624 = vld [vmem:[#allocation5 + $0x20] sm:$0xff]
    %v625 = vld [vmem:[#allocation5 + $0x28] sm:$0xff]
    %v626 = vld [vmem:[#allocation5 + $0x30] sm:$0xff]
    %v627 = vld [vmem:[#allocation5 + $0x38] sm:$0xff]
    %v628 = vld [vmem:[#allocation5 + $0x40] sm:$0xff]
    %v629 = vld [vmem:[#allocation5 + $0x48] sm:$0xff]
    %v630 = vld [vmem:[#allocation5 + $0x50] sm:$0xff]
    %v631 = vld [vmem:[#allocation5 + $0x58] sm:$0xff]
    %v632 = vld [vmem:[#allocation5 + $0x60] sm:$0xff]
    %v633 = vld [vmem:[#allocation5 + $0x68] sm:$0xff]
    %v634 = vld [vmem:[#allocation5 + $0x70] sm:$0xff]
    %v635 = vld [vmem:[#allocation5 + $0x78] sm:$0xff]
    %v636 = vld [vmem:[#allocation5 + $0x80] sm:$0xff]
    %v637 = vld [vmem:[#allocation5 + $0x88] sm:$0xff]
    %v638 = vld [vmem:[#allocation5 + $0x90] sm:$0xff]
    %v639 = vld [vmem:[#allocation5 + $0x98] sm:$0xff]
    %v640 = vld [vmem:[#allocation5 + $0xa0] sm:$0xff]
    %v641 = vld [vmem:[#allocation5 + $0xa8] sm:$0xff]
    %v642 = vld [vmem:[#allocation5 + $0xb0] sm:$0xff]
    %v643 = vld [vmem:[#allocation5 + $0xb8] sm:$0xff]
    %v644 = vld [vmem:[#allocation5 + $0xc0] sm:$0xff]
    %v645 = vld [vmem:[#allocation5 + $0xc8] sm:$0xff]
    %v646 = vld [vmem:[#allocation5 + $0xd0] sm:$0xff]
    %v647 = vld [vmem:[#allocation5 + $0xd8] sm:$0xff]
    %v648 = vld [vmem:[#allocation5 + $0xe0] sm:$0xff]
    %v649 = vld [vmem:[#allocation5 + $0xe8] sm:$0xff]
    %v650 = vld [vmem:[#allocation5 + $0xf0] sm:$0xff]
    %v651 = vld [vmem:[#allocation5 + $0xf8] sm:$0xff]
    %v652 = vld [vmem:[#allocation5 + $0x100] sm:$0xff]
    %v653 = vld [vmem:[#allocation5 + $0x108] sm:$0xff]
    %v654 = vld [vmem:[#allocation5 + $0x110] sm:$0xff]
    %v655 = vld [vmem:[#allocation5 + $0x118] sm:$0xff]
    %v656 = vld [vmem:[#allocation5 + $0x120] sm:$0xff]
    %v657 = vld [vmem:[#allocation5 + $0x128] sm:$0xff]
    %v658 = vld [vmem:[#allocation5 + $0x130] sm:$0xff]
    %v659 = vld [vmem:[#allocation5 + $0x138] sm:$0xff]
    %v660 = vld [vmem:[#allocation5 + $0x140] sm:$0xff]
    %v661 = vld [vmem:[#allocation5 + $0x148] sm:$0xff]
    %v662 = vld [vmem:[#allocation5 + $0x150] sm:$0xff]
    %v663 = vld [vmem:[#allocation5 + $0x158] sm:$0xff]
    %v664 = vld [vmem:[#allocation5 + $0x160] sm:$0xff]
    %v665 = vld [vmem:[#allocation5 + $0x168] sm:$0xff]
    %v666 = vld [vmem:[#allocation5 + $0x170] sm:$0xff]
    %v667 = vld [vmem:[#allocation5 + $0x178] sm:$0xff]
    %v668 = vld [vmem:[#allocation5 + $0x180] sm:$0xff]
    %v669 = vld [vmem:[#allocation5 + $0x188] sm:$0xff]
    %v670 = vld [vmem:[#allocation5 + $0x190] sm:$0xff]
    %v671 = vld [vmem:[#allocation5 + $0x198] sm:$0xff]
    %v672 = vld [vmem:[#allocation5 + $0x1a0] sm:$0xff]
    %v673 = vld [vmem:[#allocation5 + $0x1a8] sm:$0xff]
    %v674 = vld [vmem:[#allocation5 + $0x1b0] sm:$0xff]
    %v675 = vld [vmem:[#allocation5 + $0x1b8] sm:$0xff]
    %v676 = vld [vmem:[#allocation5 + $0x1c0] sm:$0xff]
    %v677 = vld [vmem:[#allocation5 + $0x1c8] sm:$0xff]
    %v678 = vld [vmem:[#allocation5 + $0x1d0] sm:$0xff]
    %v679 = vld [vmem:[#allocation5 + $0x1d8] sm:$0xff]
    %v680 = vld [vmem:[#allocation5 + $0x1e0] sm:$0xff]
    %v681 = vld [vmem:[#allocation5 + $0x1e8] sm:$0xff]
    %v682 = vld [vmem:[#allocation5 + $0x1f0] sm:$0xff]
    %v683 = vld [vmem:[#allocation5 + $0x1f8] sm:$0xff]
    %v684 = vld [vmem:[#allocation5 + $0x200] sm:$0xff]
    %v685 = vld [vmem:[#allocation5 + $0x208] sm:$0xff]
    %v686 = vld [vmem:[#allocation5 + $0x210] sm:$0xff]
    %v687 = vld [vmem:[#allocation5 + $0x218] sm:$0xff]
    %v688 = vld [vmem:[#allocation5 + $0x220] sm:$0xff]
    %v689 = vld [vmem:[#allocation5 + $0x228] sm:$0xff]
    %v690 = vld [vmem:[#allocation5 + $0x230] sm:$0xff]
    %v691 = vld [vmem:[#allocation5 + $0x238] sm:$0xff]
    %v692 = vld [vmem:[#allocation5 + $0x240] sm:$0xff]
    %v693 = vld [vmem:[#allocation5 + $0x248] sm:$0xff]
    %v694 = vld [vmem:[#allocation5 + $0x250] sm:$0xff]
    %v695 = vld [vmem:[#allocation5 + $0x258] sm:$0xff]
    %v696 = vld [vmem:[#allocation5 + $0x260] sm:$0xff]
    %v697 = vld [vmem:[#allocation5 + $0x268] sm:$0xff]
    %v698 = vld [vmem:[#allocation5 + $0x270] sm:$0xff]
    %v699 = vld [vmem:[#allocation5 + $0x278] sm:$0xff]
    %v700 = vld [vmem:[#allocation5 + $0x280] sm:$0xff]
    %v701 = vld [vmem:[#allocation5 + $0x288] sm:$0xff]
    %v702 = vld [vmem:[#allocation5 + $0x290] sm:$0xff]
    %v703 = vld [vmem:[#allocation5 + $0x298] sm:$0xff]
    %v704 = vld [vmem:[#allocation5 + $0x2a0] sm:$0xff]
    %v705 = vld [vmem:[#allocation5 + $0x2a8] sm:$0xff]
    %v706 = vld [vmem:[#allocation5 + $0x2b0] sm:$0xff]
    %v707 = vld [vmem:[#allocation5 + $0x2b8] sm:$0xff]
    %v708 = vld [vmem:[#allocation5 + $0x2c0] sm:$0xff]
    %v709 = vld [vmem:[#allocation5 + $0x2c8] sm:$0xff]
    %v710 = vld [vmem:[#allocation5 + $0x2d0] sm:$0xff]
    %v711 = vld [vmem:[#allocation5 + $0x2d8] sm:$0xff]
    %v712 = vld [vmem:[#allocation5 + $0x2e0] sm:$0xff]
    %v713 = vld [vmem:[#allocation5 + $0x2e8] sm:$0xff]
    %v714 = vld [vmem:[#allocation5 + $0x2f0] sm:$0xff]
    %v715 = vld [vmem:[#allocation5 + $0x2f8] sm:$0xff]
    %v716 = vld [vmem:[#allocation5 + $0x300] sm:$0xff]
    %v717 = vld [vmem:[#allocation5 + $0x308] sm:$0xff]
    %v718 = vld [vmem:[#allocation5 + $0x310] sm:$0xff]
    %v719 = vld [vmem:[#allocation5 + $0x318] sm:$0xff]
    %v720 = vld [vmem:[#allocation5 + $0x320] sm:$0xff]
    %v721 = vld [vmem:[#allocation5 + $0x328] sm:$0xff]
    %v722 = vld [vmem:[#allocation5 + $0x330] sm:$0xff]
    %v723 = vld [vmem:[#allocation5 + $0x338] sm:$0xff]
    %v724 = vld [vmem:[#allocation5 + $0x340] sm:$0xff]
    %v725 = vld [vmem:[#allocation5 + $0x348] sm:$0xff]
    %v726 = vld [vmem:[#allocation5 + $0x350] sm:$0xff]
    %v727 = vld [vmem:[#allocation5 + $0x358] sm:$0xff]
    %v728 = vld [vmem:[#allocation5 + $0x360] sm:$0xff]
    %v729 = vld [vmem:[#allocation5 + $0x368] sm:$0xff]
    %v730 = vld [vmem:[#allocation5 + $0x370] sm:$0xff]
    %v731 = vld [vmem:[#allocation5 + $0x378] sm:$0xff]
    %v732 = vld [vmem:[#allocation5 + $0x380] sm:$0xff]
    %v733 = vld [vmem:[#allocation5 + $0x388] sm:$0xff]
    %v734 = vld [vmem:[#allocation5 + $0x390] sm:$0xff]
    %v735 = vld [vmem:[#allocation5 + $0x398] sm:$0xff]
    %v736 = vld [vmem:[#allocation5 + $0x3a0] sm:$0xff]
    %v737 = vld [vmem:[#allocation5 + $0x3a8] sm:$0xff]
    %v738 = vld [vmem:[#allocation5 + $0x3b0] sm:$0xff]
    %v739 = vld [vmem:[#allocation5 + $0x3b8] sm:$0xff]
    %v740 = vld [vmem:[#allocation5 + $0x3c0] sm:$0xff]
    %v741 = vld [vmem:[#allocation5 + $0x3c8] sm:$0xff]
    %v742 = vld [vmem:[#allocation5 + $0x3d0] sm:$0xff]
    %v743 = vld [vmem:[#allocation5 + $0x3d8] sm:$0xff]
    %v744 = vld [vmem:[#allocation5 + $0x3e0] sm:$0xff]
    %v745 = vld [vmem:[#allocation5 + $0x3e8] sm:$0xff]
    %v746 = vld [vmem:[#allocation5 + $0x3f0] sm:$0xff]
    %v747 = vld [vmem:[#allocation5 + $0x3f8] sm:$0xff]
    %v748 = vld [vmem:[#allocation5 + $0x400] sm:$0xff]
    %v749 = vld [vmem:[#allocation5 + $0x408] sm:$0xff]
    %v750 = vld [vmem:[#allocation5 + $0x410] sm:$0xff]
    %v751 = vld [vmem:[#allocation5 + $0x418] sm:$0xff]
    %v752 = vld [vmem:[#allocation5 + $0x420] sm:$0xff]
    %v753 = vld [vmem:[#allocation5 + $0x428] sm:$0xff]
    %v754 = vld [vmem:[#allocation5 + $0x430] sm:$0xff]
    %v755 = vld [vmem:[#allocation5 + $0x438] sm:$0xff]
    %v756 = vld [vmem:[#allocation5 + $0x440] sm:$0xff]
    %v757 = vld [vmem:[#allocation5 + $0x448] sm:$0xff]
    %v758 = vld [vmem:[#allocation5 + $0x450] sm:$0xff]
    %v759 = vld [vmem:[#allocation5 + $0x458] sm:$0xff]
    %v760 = vld [vmem:[#allocation5 + $0x460] sm:$0xff]
    %v761 = vld [vmem:[#allocation5 + $0x468] sm:$0xff]
    %v762 = vld [vmem:[#allocation5 + $0x470] sm:$0xff]
    %v763 = vld [vmem:[#allocation5 + $0x478] sm:$0xff]
    %v764 = vld [vmem:[#allocation5 + $0x480] sm:$0xff]
    %v765 = vld [vmem:[#allocation5 + $0x488] sm:$0xff]
    %v766 = vld [vmem:[#allocation5 + $0x490] sm:$0xff]
    %v767 = vld [vmem:[#allocation5 + $0x498] sm:$0xff]
    %v768 = vld [vmem:[#allocation5 + $0x4a0] sm:$0xff]
    %v769 = vld [vmem:[#allocation5 + $0x4a8] sm:$0xff]
    %v770 = vld [vmem:[#allocation5 + $0x4b0] sm:$0xff]
    %v771 = vld [vmem:[#allocation5 + $0x4b8] sm:$0xff]
    %v772 = vld [vmem:[#allocation5 + $0x4c0] sm:$0xff]
    %v773 = vld [vmem:[#allocation5 + $0x4c8] sm:$0xff]
    %v774 = vld [vmem:[#allocation5 + $0x4d0] sm:$0xff]
    %v775 = vld [vmem:[#allocation5 + $0x4d8] sm:$0xff]
    %v776 = vld [vmem:[#allocation5 + $0x4e0] sm:$0xff]
    %v777 = vld [vmem:[#allocation5 + $0x4e8] sm:$0xff]
    %v778 = vld [vmem:[#allocation5 + $0x4f0] sm:$0xff]
    %v779 = vld [vmem:[#allocation5 + $0x4f8] sm:$0xff]
    %v780 = vld [vmem:[#allocation5 + $0x500] sm:$0xff]
    %v781 = vld [vmem:[#allocation5 + $0x508] sm:$0xff]
    %v782 = vld [vmem:[#allocation5 + $0x510] sm:$0xff]
    %v783 = vld [vmem:[#allocation5 + $0x518] sm:$0xff]
    %v784 = vld [vmem:[#allocation5 + $0x520] sm:$0xff]
    %v785 = vld [vmem:[#allocation5 + $0x528] sm:$0xff]
    %v786 = vld [vmem:[#allocation5 + $0x530] sm:$0xff]
    %v787 = vld [vmem:[#allocation5 + $0x538] sm:$0xff]
    %v788 = vld [vmem:[#allocation5 + $0x540] sm:$0xff]
    %v789 = vld [vmem:[#allocation5 + $0x548] sm:$0xff]
    %v790 = vld [vmem:[#allocation5 + $0x550] sm:$0xff]
    %v791 = vld [vmem:[#allocation5 + $0x558] sm:$0xff]
    %v792 = vld [vmem:[#allocation5 + $0x560] sm:$0xff]
    %v793 = vld [vmem:[#allocation5 + $0x568] sm:$0xff]
    %v794 = vld [vmem:[#allocation5 + $0x570] sm:$0xff]
    %v795 = vld [vmem:[#allocation5 + $0x578] sm:$0xff]
    %v796 = vld [vmem:[#allocation5 + $0x580] sm:$0xff]
    %v797 = vld [vmem:[#allocation5 + $0x588] sm:$0xff]
    %v798 = vld [vmem:[#allocation5 + $0x590] sm:$0xff]
    %v799 = vld [vmem:[#allocation5 + $0x598] sm:$0xff]
    %v800 = vld [vmem:[#allocation5 + $0x5a0] sm:$0xff]
    %v801 = vld [vmem:[#allocation5 + $0x5a8] sm:$0xff]
    %v802 = vld [vmem:[#allocation5 + $0x5b0] sm:$0xff]
    %v803 = vld [vmem:[#allocation5 + $0x5b8] sm:$0xff]
    %v804 = vld [vmem:[#allocation5 + $0x5c0] sm:$0xff]
    %v805 = vld [vmem:[#allocation5 + $0x5c8] sm:$0xff]
    %v806 = vld [vmem:[#allocation5 + $0x5d0] sm:$0xff]
    %v807 = vld [vmem:[#allocation5 + $0x5d8] sm:$0xff]
    %v808 = vld [vmem:[#allocation5 + $0x5e0] sm:$0xff]
    %v809 = vld [vmem:[#allocation5 + $0x5e8] sm:$0xff]
    %v810 = vld [vmem:[#allocation5 + $0x5f0] sm:$0xff]
    %v811 = vld [vmem:[#allocation5 + $0x5f8] sm:$0xff]
    %812 = vmatprep.subr.mxu0 %v621
    %813 = vmatpush1.msra.mxu0 %v620
    %814 = vmatprep.subr.mxu0 %v625
    %815 = vmatpush1.msra.mxu0 %v624
    %816 = vmatprep.subr.mxu0 %v629
    %817 = vmatpush1.msra.mxu0 %v628
    %818 = vmatprep.subr.mxu0 %v633
    %819 = vmatpush1.msra.mxu0 %v632
    %820 = vmatprep.subr.mxu0 %v637
    %821 = vmatpush1.msra.mxu0 %v636
    %822 = vmatprep.subr.mxu0 %v641
    %823 = vmatpush1.msra.mxu0 %v640
    %824 = vmatprep.subr.mxu0 %v645
    %825 = vmatpush1.msra.mxu0 %v644
    %826 = vmatprep.subr.mxu0 %v649
    %827 = vmatpush1.msra.mxu0 %v648
    %828 = vmatprep.subr.mxu0 %v653
    %829 = vmatpush1.msra.mxu0 %v652
    %830 = vmatprep.subr.mxu0 %v657
    %831 = vmatpush1.msra.mxu0 %v656
    %832 = vmatprep.subr.mxu0 %v661
    %833 = vmatpush1.msra.mxu0 %v660
    %834 = vmatprep.subr.mxu0 %v665
    %835 = vmatpush1.msra.mxu0 %v664
    %836 = vmatprep.subr.mxu0 %v669
    %837 = vmatpush1.msra.mxu0 %v668
    %838 = vmatprep.subr.mxu0 %v673
    %839 = vmatpush1.msra.mxu0 %v672
    %840 = vmatprep.subr.mxu0 %v677
    %841 = vmatpush1.msra.mxu0 %v676
    %842 = vmatprep.subr.mxu0 %v681
    %843 = vmatpush1.msra.mxu0 %v680
    %844 = vmatprep.subr.mxu0 %v685
    %845 = vmatpush1.msra.mxu0 %v684
    %846 = vmatprep.subr.mxu0 %v689
    %847 = vmatpush1.msra.mxu0 %v688
    %848 = vmatprep.subr.mxu0 %v693
    %849 = vmatpush1.msra.mxu0 %v692
    %850 = vmatprep.subr.mxu0 %v697
    %851 = vmatpush1.msra.mxu0 %v696
    %852 = vmatprep.subr.mxu0 %v701
    %853 = vmatpush1.msra.mxu0 %v700
    %854 = vmatprep.subr.mxu0 %v705
    %855 = vmatpush1.msra.mxu0 %v704
    %856 = vmatprep.subr.mxu0 %v709
    %857 = vmatpush1.msra.mxu0 %v708
    %858 = vmatprep.subr.mxu0 %v713
    %859 = vmatpush1.msra.mxu0 %v712
    %860 = vmatprep.subr.mxu0 %v717
    %861 = vmatpush1.msra.mxu0 %v716
    %862 = vmatprep.subr.mxu0 %v721
    %863 = vmatpush1.msra.mxu0 %v720
    %864 = vmatprep.subr.mxu0 %v725
    %865 = vmatpush1.msra.mxu0 %v724
    %866 = vmatprep.subr.mxu0 %v729
    %867 = vmatpush1.msra.mxu0 %v728
    %868 = vmatprep.subr.mxu0 %v733
    %869 = vmatpush1.msra.mxu0 %v732
    %870 = vmatprep.subr.mxu0 %v737
    %871 = vmatpush1.msra.mxu0 %v736
    %872 = vmatprep.subr.mxu0 %v741
    %873 = vmatpush1.msra.mxu0 %v740
    %874 = vmatprep.subr.mxu0 %v745
    %875 = vmatpush1.msra.mxu0 %v744
    %876 = vmatprep.mubr.f32.mxu0 %v618
    %877 = vmatmul.mubr.f32.gmra.mrb[0].mxu0 %v617
    %v878 = vpop.f32.mrb[0].mxu0
    %v879 = vadd.f32 0.0, %v878
    %v880 = vpop.f32.mrb[0].mxu0
    %v881 = vadd.f32 0.0, %v880
    %882 = vdwg.mxu0
    %883 = vmatprep.subr.mxu0 %v749
    %884 = vmatpush1.msra.mxu0 %v748
    %885 = vmatprep.subr.mxu0 %v753
    %886 = vmatpush1.msra.mxu0 %v752
    %887 = vmatprep.subr.mxu0 %v757
    %888 = vmatpush1.msra.mxu0 %v756
    %889 = vmatprep.subr.mxu0 %v761
    %890 = vmatpush1.msra.mxu0 %v760
    %891 = vmatprep.subr.mxu0 %v765
    %892 = vmatpush1.msra.mxu0 %v764
    %893 = vmatprep.subr.mxu0 %v769
    %894 = vmatpush1.msra.mxu0 %v768
    %895 = vmatprep.subr.mxu0 %v773
    %896 = vmatpush1.msra.mxu0 %v772
    %897 = vmatprep.subr.mxu0 %v777
    %898 = vmatpush1.msra.mxu0 %v776
    %899 = vmatprep.subr.mxu0 %v781
    %900 = vmatpush1.msra.mxu0 %v780
    %901 = vmatprep.subr.mxu0 %v785
    %902 = vmatpush1.msra.mxu0 %v784
    %903 = vmatprep.subr.mxu0 %v789
    %904 = vmatpush1.msra.mxu0 %v788
    %905 = vmatprep.subr.mxu0 %v793
    %906 = vmatpush1.msra.mxu0 %v792
    %907 = vmatprep.subr.mxu0 %v797
    %908 = vmatpush1.msra.mxu0 %v796
    %909 = vmatprep.subr.mxu0 %v801
    %910 = vmatpush1.msra.mxu0 %v800
    %911 = vmatprep.subr.mxu0 %v805
    %912 = vmatpush1.msra.mxu0 %v804
    %913 = vmatprep.subr.mxu0 %v809
    %914 = vmatpush1.msra.mxu0 %v808
    %915 = vmatprep.subr.mxu0 0.0
    %916 = vmatpush1.msra.mxu0 0.0
    %917 = vmatprep.subr.mxu0 0.0
    %918 = vmatpush1.msra.mxu0 0.0
    %919 = vmatprep.subr.mxu0 0.0
    %920 = vmatpush1.msra.mxu0 0.0
    %921 = vmatprep.subr.mxu0 0.0
    %922 = vmatpush1.msra.mxu0 0.0
    %923 = vmatprep.subr.mxu0 0.0
    %924 = vmatpush1.msra.mxu0 0.0
    %925 = vmatprep.subr.mxu0 0.0
    %926 = vmatpush1.msra.mxu0 0.0
    %927 = vmatprep.subr.mxu0 0.0
    %928 = vmatpush1.msra.mxu0 0.0
    %929 = vmatprep.subr.mxu0 0.0
    %930 = vmatpush1.msra.mxu0 0.0
    %931 = vmatprep.subr.mxu0 0.0
    %932 = vmatpush1.msra.mxu0 0.0
    %933 = vmatprep.subr.mxu0 0.0
    %934 = vmatpush1.msra.mxu0 0.0
    %935 = vmatprep.subr.mxu0 0.0
    %936 = vmatpush1.msra.mxu0 0.0
    %937 = vmatprep.subr.mxu0 0.0
    %938 = vmatpush1.msra.mxu0 0.0
    %939 = vmatprep.subr.mxu0 0.0
    %940 = vmatpush1.msra.mxu0 0.0
    %941 = vmatprep.subr.mxu0 0.0
    %942 = vmatpush1.msra.mxu0 0.0
    %943 = vmatprep.subr.mxu0 0.0
    %944 = vmatpush1.msra.mxu0 0.0
    %945 = vmatprep.subr.mxu0 0.0
    %946 = vmatpush1.msra.mxu0 0.0
    %947 = vmatprep.mubr.f32.mxu0 0.0
    %948 = vmatmul.mubr.f32.gmra.mrb[0].mxu0 %v619
    %v949 = vpop.f32.mrb[0].mxu0
    %v950 = vadd.f32 %v879, %v949
    %v951 = vpop.f32.mrb[0].mxu0
    %v952 = vadd.f32 %v881, %v951
    %953 = vdwg.mxu0
    %954 = vmatprep.subr.mxu0 %v623
    %955 = vmatpush1.msra.mxu0 %v622
    %956 = vmatprep.subr.mxu0 %v627
    %957 = vmatpush1.msra.mxu0 %v626
    %958 = vmatprep.subr.mxu0 %v631
    %959 = vmatpush1.msra.mxu0 %v630
    %960 = vmatprep.subr.mxu0 %v635
    %961 = vmatpush1.msra.mxu0 %v634
    %962 = vmatprep.subr.mxu0 %v639
    %963 = vmatpush1.msra.mxu0 %v638
    %964 = vmatprep.subr.mxu0 %v643
    %965 = vmatpush1.msra.mxu0 %v642
    %966 = vmatprep.subr.mxu0 %v647
    %967 = vmatpush1.msra.mxu0 %v646
    %968 = vmatprep.subr.mxu0 %v651
    %969 = vmatpush1.msra.mxu0 %v650
    %970 = vmatprep.subr.mxu0 %v655
    %971 = vmatpush1.msra.mxu0 %v654
    %972 = vmatprep.subr.mxu0 %v659
    %973 = vmatpush1.msra.mxu0 %v658
    %974 = vmatprep.subr.mxu0 %v663
    %975 = vmatpush1.msra.mxu0 %v662
    %976 = vmatprep.subr.mxu0 %v667
    %977 = vmatpush1.msra.mxu0 %v666
    %978 = vmatprep.subr.mxu0 %v671
    %979 = vmatpush1.msra.mxu0 %v670
    %980 = vmatprep.subr.mxu0 %v675
    %981 = vmatpush1.msra.mxu0 %v674
    %982 = vmatprep.subr.mxu0 %v679
    %983 = vmatpush1.msra.mxu0 %v678
    %984 = vmatprep.subr.mxu0 %v683
    %985 = vmatpush1.msra.mxu0 %v682
    %986 = vmatprep.subr.mxu0 %v687
    %987 = vmatpush1.msra.mxu0 %v686
    %988 = vmatprep.subr.mxu0 %v691
    %989 = vmatpush1.msra.mxu0 %v690
    %990 = vmatprep.subr.mxu0 %v695
    %991 = vmatpush1.msra.mxu0 %v694
    %992 = vmatprep.subr.mxu0 %v699
    %993 = vmatpush1.msra.mxu0 %v698
    %994 = vmatprep.subr.mxu0 %v703
    %995 = vmatpush1.msra.mxu0 %v702
    %996 = vmatprep.subr.mxu0 %v707
    %997 = vmatpush1.msra.mxu0 %v706
    %998 = vmatprep.subr.mxu0 %v711
    %999 = vmatpush1.msra.mxu0 %v710
    %1000 = vmatprep.subr.mxu0 %v715
    %1001 = vmatpush1.msra.mxu0 %v714
    %1002 = vmatprep.subr.mxu0 %v719
    %1003 = vmatpush1.msra.mxu0 %v718
    %1004 = vmatprep.subr.mxu0 %v723
    %1005 = vmatpush1.msra.mxu0 %v722
    %1006 = vmatprep.subr.mxu0 %v727
    %1007 = vmatpush1.msra.mxu0 %v726
    %1008 = vmatprep.subr.mxu0 %v731
    %1009 = vmatpush1.msra.mxu0 %v730
    %1010 = vmatprep.subr.mxu0 %v735
    %1011 = vmatpush1.msra.mxu0 %v734
    %1012 = vmatprep.subr.mxu0 %v739
    %1013 = vmatpush1.msra.mxu0 %v738
    %1014 = vmatprep.subr.mxu0 %v743
    %1015 = vmatpush1.msra.mxu0 %v742
    %1016 = vmatprep.subr.mxu0 %v747
    %1017 = vmatpush1.msra.mxu0 %v746
    %1018 = vmatprep.mubr.f32.mxu0 %v618
    %1019 = vmatmul.mubr.f32.gmra.mrb[0].mxu0 %v617
    %v1020 = vpop.f32.mrb[0].mxu0
    %v1021 = vadd.f32 0.0, %v1020
    %v1022 = vpop.f32.mrb[0].mxu0
    %v1023 = vadd.f32 0.0, %v1022
    %1024 = vdwg.mxu0
    %1025 = vmatprep.subr.mxu0 %v751
    %1026 = vmatpush1.msra.mxu0 %v750
    %1027 = vmatprep.subr.mxu0 %v755
    %1028 = vmatpush1.msra.mxu0 %v754
    %1029 = vmatprep.subr.mxu0 %v759
    %1030 = vmatpush1.msra.mxu0 %v758
    %1031 = vmatprep.subr.mxu0 %v763
    %1032 = vmatpush1.msra.mxu0 %v762
    %1033 = vmatprep.subr.mxu0 %v767
    %1034 = vmatpush1.msra.mxu0 %v766
    %1035 = vmatprep.subr.mxu0 %v771
    %1036 = vmatpush1.msra.mxu0 %v770
    %1037 = vmatprep.subr.mxu0 %v775
    %1038 = vmatpush1.msra.mxu0 %v774
    %1039 = vmatprep.subr.mxu0 %v779
    %1040 = vmatpush1.msra.mxu0 %v778
    %1041 = vmatprep.subr.mxu0 %v783
    %1042 = vmatpush1.msra.mxu0 %v782
    %1043 = vmatprep.subr.mxu0 %v787
    %1044 = vmatpush1.msra.mxu0 %v786
    %1045 = vmatprep.subr.mxu0 %v791
    %1046 = vmatpush1.msra.mxu0 %v790
    %1047 = vmatprep.subr.mxu0 %v795
    %1048 = vmatpush1.msra.mxu0 %v794
    %1049 = vmatprep.subr.mxu0 %v799
    %1050 = vmatpush1.msra.mxu0 %v798
    %1051 = vmatprep.subr.mxu0 %v803
    %1052 = vmatpush1.msra.mxu0 %v802
    %1053 = vmatprep.subr.mxu0 %v807
    %1054 = vmatpush1.msra.mxu0 %v806
    %1055 = vmatprep.subr.mxu0 %v811
    %1056 = vmatpush1.msra.mxu0 %v810
    %1057 = vmatprep.subr.mxu0 0.0
    %1058 = vmatpush1.msra.mxu0 0.0
    %1059 = vmatprep.subr.mxu0 0.0
    %1060 = vmatpush1.msra.mxu0 0.0
    %1061 = vmatprep.subr.mxu0 0.0
    %1062 = vmatpush1.msra.mxu0 0.0
    %1063 = vmatprep.subr.mxu0 0.0
    %1064 = vmatpush1.msra.mxu0 0.0
    %1065 = vmatprep.subr.mxu0 0.0
    %1066 = vmatpush1.msra.mxu0 0.0
    %1067 = vmatprep.subr.mxu0 0.0
    %1068 = vmatpush1.msra.mxu0 0.0
    %1069 = vmatprep.subr.mxu0 0.0
    %1070 = vmatpush1.msra.mxu0 0.0
    %1071 = vmatprep.subr.mxu0 0.0
    %1072 = vmatpush1.msra.mxu0 0.0
    %1073 = vmatprep.subr.mxu0 0.0
    %1074 = vmatpush1.msra.mxu0 0.0
    %1075 = vmatprep.subr.mxu0 0.0
    %1076 = vmatpush1.msra.mxu0 0.0
    %1077 = vmatprep.subr.mxu0 0.0
    %1078 = vmatpush1.msra.mxu0 0.0
    %1079 = vmatprep.subr.mxu0 0.0
    %1080 = vmatpush1.msra.mxu0 0.0
    %1081 = vmatprep.subr.mxu0 0.0
    %1082 = vmatpush1.msra.mxu0 0.0
    %1083 = vmatprep.subr.mxu0 0.0
    %1084 = vmatpush1.msra.mxu0 0.0
    %1085 = vmatprep.subr.mxu0 0.0
    %1086 = vmatpush1.msra.mxu0 0.0
    %1087 = vmatprep.subr.mxu0 0.0
    %1088 = vmatpush1.msra.mxu0 0.0
    %1089 = vmatprep.mubr.f32.mxu0 0.0
    %1090 = vmatmul.mubr.f32.gmra.mrb[0].mxu0 %v619
    %v1091 = vpop.f32.mrb[0].mxu0
    %v1092 = vadd.f32 %v1021, %v1091
    %v1093 = vpop.f32.mrb[0].mxu0
    %v1094 = vadd.f32 %v1023, %v1093
    %1095 = vdwg.mxu0
    %v1096 = vmax.f32 %v950, %v952
    %v1097 = vmax.f32 %v1092, %v1094
    %v1098 = vmax.f32 %v1096, %v1097
    %v1099 = vld [vmem:[%s4] sm:$0x1]
    %v1101 = vlaneseq
    %v1102 = vshrl.u32 %v1101, 7
    %v1103 = vsub.s32 0, %v1102
    %v1104 = vrot.slane %v1099, %v1103
    %v1106 = vadd.f32 %v1098, %v1104
    %v1107 = vmax.f32 %v1106, 0.0
    %v1108 = vld [vmem:[%s5] sm:$0xff]
    %v1109 = vld [vmem:[%s5 + $0x8] sm:$0xff]
    %v1110 = vld [vmem:[%s5 + $0x10] sm:$0xff]
    %v1111 = vld [vmem:[%s5 + $0x18] sm:$0xff]
    %v1112 = vld [vmem:[%s5 + $0x20] sm:$0xff]
    %v1113 = vld [vmem:[%s5 + $0x28] sm:$0xff]
    %v1114 = vld [vmem:[%s5 + $0x30] sm:$0xff]
    %v1115 = vld [vmem:[%s5 + $0x38] sm:$0xff]
    %v1116 = vld [vmem:[%s5 + $0x40] sm:$0xff]
    %v1117 = vld [vmem:[%s5 + $0x48] sm:$0xff]
    %v1118 = vld [vmem:[%s5 + $0x50] sm:$0xff]
    %v1119 = vld [vmem:[%s5 + $0x58] sm:$0xff]
    %v1120 = vld [vmem:[%s5 + $0x60] sm:$0xff]
    %v1121 = vld [vmem:[%s5 + $0x68] sm:$0xff]
    %v1122 = vld [vmem:[%s5 + $0x70] sm:$0xff]
    %v1123 = vld [vmem:[%s5 + $0x78] sm:$0xff]
    %v1124 = vld [vmem:[%s6] sm:$0x1]
    %v1126 = vlaneseq
    %v1127 = vshrl.u32 %v1126, 7
    %v1128 = vsub.s32 0, %v1127
    %v1129 = vrot.slane %v1124, %v1128
    %1131 = vmatprep.subr.mxu0 0.0
    %1132 = vmatpush1.msra.mxu0 %v1108
    %1133 = vmatprep.subr.mxu0 0.0
    %1134 = vmatpush1.msra.mxu0 %v1109
    %1135 = vmatprep.subr.mxu0 0.0
    %1136 = vmatpush1.msra.mxu0 %v1110
    %1137 = vmatprep.subr.mxu0 0.0
    %1138 = vmatpush1.msra.mxu0 %v1111
    %1139 = vmatprep.subr.mxu0 0.0
    %1140 = vmatpush1.msra.mxu0 %v1112
    %1141 = vmatprep.subr.mxu0 0.0
    %1142 = vmatpush1.msra.mxu0 %v1113
    %1143 = vmatprep.subr.mxu0 0.0
    %1144 = vmatpush1.msra.mxu0 %v1114
    %1145 = vmatprep.subr.mxu0 0.0
    %1146 = vmatpush1.msra.mxu0 %v1115
    %1147 = vmatprep.subr.mxu0 0.0
    %1148 = vmatpush1.msra.mxu0 %v1116
    %1149 = vmatprep.subr.mxu0 0.0
    %1150 = vmatpush1.msra.mxu0 %v1117
    %1151 = vmatprep.subr.mxu0 0.0
    %1152 = vmatpush1.msra.mxu0 %v1118
    %1153 = vmatprep.subr.mxu0 0.0
    %1154 = vmatpush1.msra.mxu0 %v1119
    %1155 = vmatprep.subr.mxu0 0.0
    %1156 = vmatpush1.msra.mxu0 %v1120
    %1157 = vmatprep.subr.mxu0 0.0
    %1158 = vmatpush1.msra.mxu0 %v1121
    %1159 = vmatprep.subr.mxu0 0.0
    %1160 = vmatpush1.msra.mxu0 %v1122
    %1161 = vmatprep.subr.mxu0 0.0
    %1162 = vmatpush1.msra.mxu0 %v1123
    %1163 = vmatprep.subr.mxu0 0.0
    %1164 = vmatpush1.msra.mxu0 0.0
    %1165 = vmatprep.subr.mxu0 0.0
    %1166 = vmatpush1.msra.mxu0 0.0
    %1167 = vmatprep.subr.mxu0 0.0
    %1168 = vmatpush1.msra.mxu0 0.0
    %1169 = vmatprep.subr.mxu0 0.0
    %1170 = vmatpush1.msra.mxu0 0.0
    %1171 = vmatprep.subr.mxu0 0.0
    %1172 = vmatpush1.msra.mxu0 0.0
    %1173 = vmatprep.subr.mxu0 0.0
    %1174 = vmatpush1.msra.mxu0 0.0
    %1175 = vmatprep.subr.mxu0 0.0
    %1176 = vmatpush1.msra.mxu0 0.0
    %1177 = vmatprep.subr.mxu0 0.0
    %1178 = vmatpush1.msra.mxu0 0.0
    %1179 = vmatprep.subr.mxu0 0.0
    %1180 = vmatpush1.msra.mxu0 0.0
    %1181 = vmatprep.subr.mxu0 0.0
    %1182 = vmatpush1.msra.mxu0 0.0
    %1183 = vmatprep.subr.mxu0 0.0
    %1184 = vmatpush1.msra.mxu0 0.0
    %1185 = vmatprep.subr.mxu0 0.0
    %1186 = vmatpush1.msra.mxu0 0.0
    %1187 = vmatprep.subr.mxu0 0.0
    %1188 = vmatpush1.msra.mxu0 0.0
    %1189 = vmatprep.subr.mxu0 0.0
    %1190 = vmatpush1.msra.mxu0 0.0
    %1191 = vmatprep.subr.mxu0 0.0
    %1192 = vmatpush1.msra.mxu0 0.0
    %1193 = vmatprep.subr.mxu0 0.0
    %1194 = vmatpush1.msra.mxu0 0.0
    %1195 = vmatprep.mubr.f32.mxu0 0.0
    %1196 = vmatmul.mubr.f32.gmra.mrb[0].mxu0 %v1107
    %v1197 = vpop.f32.mrb[0].mxu0
    %v1198 = vadd.f32 %v1129, %v1197
    %v1199 = vpop.f32.mrb[0].mxu0
    %1200 = vdwg.mxu0
    %v1201 = vmax.f32 %v1198, 0.0
    %v1202 = vld [vmem:[%s7] sm:$0xff]
    %v1203 = vld [vmem:[%s7 + $0x8] sm:$0xff]
    %v1204 = vld [vmem:[%s7 + $0x10] sm:$0xff]
    %v1205 = vld [vmem:[%s7 + $0x18] sm:$0xff]
    %v1206 = vld [vmem:[%s7 + $0x20] sm:$0xff]
    %v1207 = vld [vmem:[%s7 + $0x28] sm:$0xff]
    %v1208 = vld [vmem:[%s7 + $0x30] sm:$0xff]
    %v1209 = vld [vmem:[%s7 + $0x38] sm:$0xff]
    %v1210 = vld [vmem:[%s7 + $0x40] sm:$0xff]
    %v1211 = vld [vmem:[%s7 + $0x48] sm:$0xff]
    %v1212 = vld [vmem:[%s7 + $0x50] sm:$0xff]
    %v1213 = vld [vmem:[%s7 + $0x58] sm:$0xff]
    %v1214 = vld [vmem:[%s7 + $0x60] sm:$0xff]
    %v1215 = vld [vmem:[%s7 + $0x68] sm:$0xff]
    %v1216 = vld [vmem:[%s7 + $0x70] sm:$0xff]
    %v1217 = vld [vmem:[%s7 + $0x78] sm:$0xff]
    %v1218 = vld [vmem:[%s8] sm:$0x1]
    %v1220 = vlaneseq
    %v1221 = vshrl.u32 %v1220, 7
    %v1222 = vsub.s32 0, %v1221
    %v1223 = vrot.slane %v1218, %v1222
    %1225 = vmatprep.subr.mxu0 0.0
    %1226 = vmatpush1.msra.mxu0 %v1202
    %1227 = vmatprep.subr.mxu0 0.0
    %1228 = vmatpush1.msra.mxu0 %v1203
    %1229 = vmatprep.subr.mxu0 0.0
    %1230 = vmatpush1.msra.mxu0 %v1204
    %1231 = vmatprep.subr.mxu0 0.0
    %1232 = vmatpush1.msra.mxu0 %v1205
    %1233 = vmatprep.subr.mxu0 0.0
    %1234 = vmatpush1.msra.mxu0 %v1206
    %1235 = vmatprep.subr.mxu0 0.0
    %1236 = vmatpush1.msra.mxu0 %v1207
    %1237 = vmatprep.subr.mxu0 0.0
    %1238 = vmatpush1.msra.mxu0 %v1208
    %1239 = vmatprep.subr.mxu0 0.0
    %1240 = vmatpush1.msra.mxu0 %v1209
    %1241 = vmatprep.subr.mxu0 0.0
    %1242 = vmatpush1.msra.mxu0 %v1210
    %1243 = vmatprep.subr.mxu0 0.0
    %1244 = vmatpush1.msra.mxu0 %v1211
    %1245 = vmatprep.subr.mxu0 0.0
    %1246 = vmatpush1.msra.mxu0 %v1212
    %1247 = vmatprep.subr.mxu0 0.0
    %1248 = vmatpush1.msra.mxu0 %v1213
    %1249 = vmatprep.subr.mxu0 0.0
    %1250 = vmatpush1.msra.mxu0 %v1214
    %1251 = vmatprep.subr.mxu0 0.0
    %1252 = vmatpush1.msra.mxu0 %v1215
    %1253 = vmatprep.subr.mxu0 0.0
    %1254 = vmatpush1.msra.mxu0 %v1216
    %1255 = vmatprep.subr.mxu0 0.0
    %1256 = vmatpush1.msra.mxu0 %v1217
    %1257 = vmatprep.subr.mxu0 0.0
    %1258 = vmatpush1.msra.mxu0 0.0
    %1259 = vmatprep.subr.mxu0 0.0
    %1260 = vmatpush1.msra.mxu0 0.0
    %1261 = vmatprep.subr.mxu0 0.0
    %1262 = vmatpush1.msra.mxu0 0.0
    %1263 = vmatprep.subr.mxu0 0.0
    %1264 = vmatpush1.msra.mxu0 0.0
    %1265 = vmatprep.subr.mxu0 0.0
    %1266 = vmatpush1.msra.mxu0 0.0
    %1267 = vmatprep.subr.mxu0 0.0
    %1268 = vmatpush1.msra.mxu0 0.0
    %1269 = vmatprep.subr.mxu0 0.0
    %1270 = vmatpush1.msra.mxu0 0.0
    %1271 = vmatprep.subr.mxu0 0.0
    %1272 = vmatpush1.msra.mxu0 0.0
    %1273 = vmatprep.subr.mxu0 0.0
    %1274 = vmatpush1.msra.mxu0 0.0
    %1275 = vmatprep.subr.mxu0 0.0
    %1276 = vmatpush1.msra.mxu0 0.0
    %1277 = vmatprep.subr.mxu0 0.0
    %1278 = vmatpush1.msra.mxu0 0.0
    %1279 = vmatprep.subr.mxu0 0.0
    %1280 = vmatpush1.msra.mxu0 0.0
    %1281 = vmatprep.subr.mxu0 0.0
    %1282 = vmatpush1.msra.mxu0 0.0
    %1283 = vmatprep.subr.mxu0 0.0
    %1284 = vmatpush1.msra.mxu0 0.0
    %1285 = vmatprep.subr.mxu0 0.0
    %1286 = vmatpush1.msra.mxu0 0.0
    %1287 = vmatprep.subr.mxu0 0.0
    %1288 = vmatpush1.msra.mxu0 0.0
    %1289 = vmatprep.mubr.f32.mxu0 0.0
    %1290 = vmatmul.mubr.f32.gmra.mrb[0].mxu0 %v1201
    %v1291 = vpop.f32.mrb[0].mxu0
    %v1292 = vadd.f32 %v1223, %v1291
    %v1293 = vpop.f32.mrb[0].mxu0
    %1294 = vdwg.mxu0
    %vm1295 = vcmask 80896
    %v1296 = vsel %vm1295, %v1292, -inf
    %1297 = vmax.xlane.f32.xlu0 %v1296
    %v1298 = vpop.xlane.xlu0 %1297
    %v1299 = vsub.f32 %v1292, %v1298
    %v1300 = vmul.f32 %v1299, 1.442695
    %v1301 = vpow.pop %v1300
    %v1302 = vsel %vm1295, %v1301, 0.0
    %1303 = vadd.xlane.f32.xlu0 %v1302
    %v1304 = vpop.xlane.xlu0 %1303
    %v1305 = vlog2.pop %v1304
    %v1306 = vmul.f32 %v1305, 0.6931472
    %v1307 = vsub.f32 %v1299, %v1306
    %1308 = vst.msk [vmem:[#allocation7] sm:$0xff] %vm1295, %v1307
    // Predicated region
    $region46: #{digits_forward.1} parent=1 // pred_check
      _
    $region47: #{digits_forward.1} parent=1 // pred_check_branch
      %1310 = sbr.rel (0) target = $region49
    $region48: #{digits_forward.1} parent=1 // pred_region
      %s1312 = ssub.s32 128, 128
      %1313 = vsyncadd [#allocation4], %s1312
      %s1315 = sshll.u32 [#allocation7], 4
      %s1316 = int_to_ptr.vmem [resolvable:$true] %s1315
      %1318 = dma.vmem_to_hbm [thread:$0]  %s1316, 128, %s9, [#allocation4]
    $region49: #{digits_forward.1} parent=1 // pred_fallthru
      _
    // Predicated region
    $region50: #{digits_forward.1} parent=1 // pred_check
      _
    $region51: #{digits_forward.1} parent=1 // pred_check_branch
      %1320 = sbr.rel (0) target = $region53
    $region52: #{digits_forward.1} parent=1 // pred_region
      %1321 = dma.done [#allocation4], 128
    $region53: #{digits_forward.1} parent=1 // pred_fallthru
      _
    %1322 = vsyncpa [#allocation3], 1
    %1323 = vsyncpa [#allocation6], 1
    %1324 = vsyncpa [#allocation4], 1

</llo_original>
